<compile_context>
chip_gen: v7x
topology: tpu7x:2x2x1
jax: 0.10.0
libtpu: 0.0.40
codegen_flags: <defaults>
</compile_context>

<pallas_src>
import functools

import jax
import jax.numpy as jnp
import numpy as np
from jax.experimental import pallas as pl
from jax.experimental.pallas import tpu as pltpu

_LANES = 128    # lane width of one spatial chunk
_N_PARTS = 3    # exact bf16 parts per f32 value (hi/mid/lo)


def _postprocess_kernel(x_ref, p_ref, o_ref, parts_ref):
    """Fused clamp/scale + channel-reverse + CHW->HWC lane interleave.

    x_ref:     (C, tR, L)        f32  input tile (batch 0, all channels)
    p_ref:     (C*3*L, C*L)      bf16 constant 0/1 scatter matrix
    o_ref:     (tR, C*L)         f32  interleaved output tile ((H, W, C) row-major view)
    parts_ref: (tR, C*3*L)       bf16 scratch holding the exact 3-way bf16 split
    """
    C, _, L = x_ref.shape
    for c in range(C):
        v = jnp.clip(x_ref[c], 0.0, 1.0) * 255.0            # f32, VPU
        # Exact 3-way split: v == hi + mid + lo, every part bf16-representable, so the
        # bf16 MXU scatter below reconstructs v to within ~1 ulp of f32.
        hi = v.astype(jnp.bfloat16)
        resid = v - hi.astype(jnp.float32)
        mid = resid.astype(jnp.bfloat16)
        lo = (resid - mid.astype(jnp.float32)).astype(jnp.bfloat16)
        base = c * _N_PARTS * L
        parts_ref[:, base:base + L] = hi
        parts_ref[:, base + L:base + 2 * L] = mid
        parts_ref[:, base + 2 * L:base + 3 * L] = lo
    # Lane interleave: out[:, l*C + c_out] = (channel [2,1,0][c_out]) at spatial lane l,
    # done as one MXU matmul against a constant 0/1 scatter matrix.  f32 accumulation
    # sums the hi/mid/lo parts back together; all other products are exact zeros.
    o_ref[...] = jnp.dot(parts_ref[...], p_ref[...],
                         preferred_element_type=jnp.float32)


def _scatter_matrix(C, L):
    """(C*3*L, C*L) 0/1 matrix scattering part k of input channel c at lane l to output
    lane l*C + (C-1-c).  The (C-1-c) reversal equals the module's [2,1,0] gather for
    C == 3 (asserted in the wrapper)."""
    P = np.zeros((C * _N_PARTS * L, C * L), np.float32)
    l = np.arange(L)
    for c_in in range(C):
        c_out = C - 1 - c_in
        for k in range(_N_PARTS):
            P[c_in * _N_PARTS * L + k * L + l, l * C + c_out] = 1.0
    return jnp.asarray(P, dtype=jnp.bfloat16)   # 0.0 / 1.0 are exact in bf16


@functools.partial(jax.jit, static_argnames=("max_rows_per_block",))
def postprocess(x, *, max_rows_per_block=2048):
    """x: (N, C, H, W) float32, C == 3.  Returns (H, W, C) float32 (only batch 0 used)."""
    N, C, H, W = x.shape
    if C != 3:
        raise NotImplementedError("Postprocess kernel assumes C == 3 ([2,1,0] gather).")
    x = x.astype(jnp.float32)

    L = _LANES
    S = H * W
    # Pad flattened spatial so R = Sp // L is a multiple of 8: every block is then full
    # (8,128) tiles (lane-dense stores, MXU M-dim always a multiple of 8).
    Sp = pl.cdiv(S, 8 * L) * (8 * L)
    R = Sp // L
    if Sp == S:
        x_view = x.reshape(N, C, R, L)                 # metadata-only reshape, no copy
    else:
        # TODO(synk): handle the ragged spatial tail in-kernel instead of this pad copy
        # (only taken when H*W is not a multiple of 1024; copies batch 0 only).
        x_view = jnp.pad(x[:1].reshape(1, C, S),
                         ((0, 0), (0, 0), (0, Sp - S))).reshape(1, C, R, L)

    max_rows_per_block = max(8, (max_rows_per_block // 8) * 8)
    tR = min(R, max_rows_per_block)                    # both multiples of 8
    grid = (pl.cdiv(R, tR),)
    p_mat = _scatter_matrix(C, L)

    out = pl.pallas_call(
        _postprocess_kernel,
        out_shape=jax.ShapeDtypeStruct((R, C * L), jnp.float32),
        grid=grid,
        in_specs=[
            # Batch 0 only (matches the module's `[0]`); all channels per grid step.
            pl.BlockSpec((pl.Squeezed(), C, tR, L), lambda r: (0, 0, r, 0)),
            # Constant scatter matrix: same block every step -> fetched once, stays resident.
            pl.BlockSpec((C * _N_PARTS * L, C * L), lambda r: (0, 0)),
        ],
        out_specs=pl.BlockSpec((tR, C * L), lambda r: (r, 0)),
        scratch_shapes=[pltpu.VMEM((tR, C * _N_PARTS * L), jnp.bfloat16)],
        compiler_params=pltpu.CompilerParams(
            dimension_semantics=("parallel",),
            vmem_limit_bytes=40 * 1024 * 1024,
        ),
    )(x_view, p_mat)

    # (R, C*L) row-major == (Sp, C) row-major == padded (H, W, C); undo padding if any.
    if Sp == S:
        return out.reshape(H, W, C)
    return out.reshape(Sp, C)[:S].reshape(H, W, C)


def _reference(x):
    # Pure-JAX reference mirroring the PyTorch forward exactly.
    y = jnp.clip(x, 0.0, 1.0)[0]          # (C, H, W)
    y = jnp.transpose(y, (1, 2, 0))       # (H, W, C)
    y = y[:, :, ::-1]                     # == [2, 1, 0] for C == 3
    return y * 255.0


if __name__ == "__main__":
    key = jax.random.PRNGKey(0)
    cases = [
        ((2, 3, 16, 16), 2048),   # batch > 1 (padded path), only batch 0 must be read
        ((2, 3, 32, 32), 2048),   # S = 1024: zero-copy no-pad path, batch-0 via index_map
        ((1, 3, 24, 32), 2048),   # padded path
        ((1, 3, 10, 14), 2048),   # odd spatial size -> padded path
        ((1, 3, 40, 64), 16),     # small row tile -> multi-step grid + partial edge block
    ]
    for shp, max_rows in cases:
        key, sub = jax.random.split(key)
        x = jax.random.uniform(sub, shp, dtype=jnp.float32, minval=-0.5, maxval=1.5)
        out = jax.block_until_ready(postprocess(x, max_rows_per_block=max_rows))
        ref = _reference(x)
        assert out.shape == (shp[2], shp[3], shp[1]), (out.shape, shp)
        assert jnp.allclose(out, ref, atol=1e-4, rtol=1e-5), f"mismatch vs reference for {shp}"
    print("KERNEL_OK")
</pallas_src>

<mosaic_0001>
module attributes {stable_mosaic.version = 11 : i64} {
  func.func @_postprocess_kernel(%arg0: i32, %arg1: memref<1x3x8x128xf32, #tpu.memory_space<vmem>>, %arg2: memref<1152x384xbf16, #tpu.memory_space<vmem>>, %arg3: memref<8x384xf32, #tpu.memory_space<vmem>>, %arg4: memref<8x1152xbf16, #tpu.memory_space<vmem>>) attributes {dimension_semantics = [#tpu.dimension_semantics<parallel>], iteration_bounds = array<i64: 1>, scalar_prefetch = 0 : i64, scratch_operands = 1 : i64, tpu.core_type = #tpu.core_type<tc>, window_params = [{transform_indices = @transform_0, window_bounds = array<i64: 1, 3, 8, 128>}, {pipeline_mode = #tpu.pipeline_mode<synchronous>, transform_indices = @transform_1, window_bounds = array<i64: 1152, 384>}, {transform_indices = @transform_2, window_bounds = array<i64: 8, 384>}]} {
    %c0 = arith.constant 0 : index
    %c0_0 = arith.constant 0 : index
    %c0_1 = arith.constant 0 : index
    %c0_2 = arith.constant 0 : index
    %0 = vector.load %arg1[%c0, %c0_0, %c0_1, %c0_2] : memref<1x3x8x128xf32, #tpu.memory_space<vmem>>, vector<1x1x8x128xf32>
    %1 = vector.shape_cast %0 : vector<1x1x8x128xf32> to vector<8x128xf32>
    %cst = arith.constant 0.000000e+00 : f32
    %cst_3 = arith.constant 1.000000e+00 : f32
    %2 = vector.broadcast %cst : f32 to vector<8x128xf32>
    %3 = arith.maximumf %2, %1 : vector<8x128xf32>
    %4 = vector.broadcast %cst_3 : f32 to vector<8x128xf32>
    %5 = arith.minimumf %4, %3 : vector<8x128xf32>
    %cst_4 = arith.constant 2.550000e+02 : f32
    %6 = vector.broadcast %cst_4 : f32 to vector<8x128xf32>
    %7 = arith.mulf %5, %6 : vector<8x128xf32>
    %8 = arith.truncf %7 : vector<8x128xf32> to vector<8x128xbf16>
    %9 = arith.extf %8 : vector<8x128xbf16> to vector<8x128xf32>
    %10 = arith.subf %7, %9 : vector<8x128xf32>
    %11 = arith.truncf %10 : vector<8x128xf32> to vector<8x128xbf16>
    %12 = arith.extf %11 : vector<8x128xbf16> to vector<8x128xf32>
    %13 = arith.subf %10, %12 : vector<8x128xf32>
    %14 = arith.truncf %13 : vector<8x128xf32> to vector<8x128xbf16>
    %c0_5 = arith.constant 0 : index
    %c0_6 = arith.constant 0 : index
    %15 = vector.load %arg4[%c0_5, %c0_6] : memref<8x1152xbf16, #tpu.memory_space<vmem>>, vector<8x128xbf16>
    tpu.vector_store %arg4[%c0_5, %c0_6], %8 {strides = array<i32>} : memref<8x1152xbf16, #tpu.memory_space<vmem>>, vector<8x128xbf16>,
    %c0_7 = arith.constant 0 : index
    %c128 = arith.constant 128 : index
    %16 = vector.load %arg4[%c0_7, %c128] : memref<8x1152xbf16, #tpu.memory_space<vmem>>, vector<8x128xbf16>
    tpu.vector_store %arg4[%c0_7, %c128], %11 {strides = array<i32>} : memref<8x1152xbf16, #tpu.memory_space<vmem>>, vector<8x128xbf16>,
    %c0_8 = arith.constant 0 : index
    %c256 = arith.constant 256 : index
    %17 = vector.load %arg4[%c0_8, %c256] : memref<8x1152xbf16, #tpu.memory_space<vmem>>, vector<8x128xbf16>
    tpu.vector_store %arg4[%c0_8, %c256], %14 {strides = array<i32>} : memref<8x1152xbf16, #tpu.memory_space<vmem>>, vector<8x128xbf16>,
    %c0_9 = arith.constant 0 : index
    %c1 = arith.constant 1 : index
    %c0_10 = arith.constant 0 : index
    %c0_11 = arith.constant 0 : index
    %18 = vector.load %arg1[%c0_9, %c1, %c0_10, %c0_11] : memref<1x3x8x128xf32, #tpu.memory_space<vmem>>, vector<1x1x8x128xf32>
    %19 = vector.shape_cast %18 : vector<1x1x8x128xf32> to vector<8x128xf32>
    %cst_12 = arith.constant 0.000000e+00 : f32
    %cst_13 = arith.constant 1.000000e+00 : f32
    %20 = vector.broadcast %cst_12 : f32 to vector<8x128xf32>
    %21 = arith.maximumf %20, %19 : vector<8x128xf32>
    %22 = vector.broadcast %cst_13 : f32 to vector<8x128xf32>
    %23 = arith.minimumf %22, %21 : vector<8x128xf32>
    %cst_14 = arith.constant 2.550000e+02 : f32
    %24 = vector.broadcast %cst_14 : f32 to vector<8x128xf32>
    %25 = arith.mulf %23, %24 : vector<8x128xf32>
    %26 = arith.truncf %25 : vector<8x128xf32> to vector<8x128xbf16>
    %27 = arith.extf %26 : vector<8x128xbf16> to vector<8x128xf32>
    %28 = arith.subf %25, %27 : vector<8x128xf32>
    %29 = arith.truncf %28 : vector<8x128xf32> to vector<8x128xbf16>
    %30 = arith.extf %29 : vector<8x128xbf16> to vector<8x128xf32>
    %31 = arith.subf %28, %30 : vector<8x128xf32>
    %32 = arith.truncf %31 : vector<8x128xf32> to vector<8x128xbf16>
    %c0_15 = arith.constant 0 : index
    %c384 = arith.constant 384 : index
    %33 = vector.load %arg4[%c0_15, %c384] : memref<8x1152xbf16, #tpu.memory_space<vmem>>, vector<8x128xbf16>
    tpu.vector_store %arg4[%c0_15, %c384], %26 {strides = array<i32>} : memref<8x1152xbf16, #tpu.memory_space<vmem>>, vector<8x128xbf16>,
    %c0_16 = arith.constant 0 : index
    %c512 = arith.constant 512 : index
    %34 = vector.load %arg4[%c0_16, %c512] : memref<8x1152xbf16, #tpu.memory_space<vmem>>, vector<8x128xbf16>
    tpu.vector_store %arg4[%c0_16, %c512], %29 {strides = array<i32>} : memref<8x1152xbf16, #tpu.memory_space<vmem>>, vector<8x128xbf16>,
    %c0_17 = arith.constant 0 : index
    %c640 = arith.constant 640 : index
    %35 = vector.load %arg4[%c0_17, %c640] : memref<8x1152xbf16, #tpu.memory_space<vmem>>, vector<8x128xbf16>
    tpu.vector_store %arg4[%c0_17, %c640], %32 {strides = array<i32>} : memref<8x1152xbf16, #tpu.memory_space<vmem>>, vector<8x128xbf16>,
    %c0_18 = arith.constant 0 : index
    %c2 = arith.constant 2 : index
    %c0_19 = arith.constant 0 : index
    %c0_20 = arith.constant 0 : index
    %36 = vector.load %arg1[%c0_18, %c2, %c0_19, %c0_20] : memref<1x3x8x128xf32, #tpu.memory_space<vmem>>, vector<1x1x8x128xf32>
    %37 = vector.shape_cast %36 : vector<1x1x8x128xf32> to vector<8x128xf32>
    %cst_21 = arith.constant 0.000000e+00 : f32
    %cst_22 = arith.constant 1.000000e+00 : f32
    %38 = vector.broadcast %cst_21 : f32 to vector<8x128xf32>
    %39 = arith.maximumf %38, %37 : vector<8x128xf32>
    %40 = vector.broadcast %cst_22 : f32 to vector<8x128xf32>
    %41 = arith.minimumf %40, %39 : vector<8x128xf32>
    %cst_23 = arith.constant 2.550000e+02 : f32
    %42 = vector.broadcast %cst_23 : f32 to vector<8x128xf32>
    %43 = arith.mulf %41, %42 : vector<8x128xf32>
    %44 = arith.truncf %43 : vector<8x128xf32> to vector<8x128xbf16>
    %45 = arith.extf %44 : vector<8x128xbf16> to vector<8x128xf32>
    %46 = arith.subf %43, %45 : vector<8x128xf32>
    %47 = arith.truncf %46 : vector<8x128xf32> to vector<8x128xbf16>
    %48 = arith.extf %47 : vector<8x128xbf16> to vector<8x128xf32>
    %49 = arith.subf %46, %48 : vector<8x128xf32>
    %50 = arith.truncf %49 : vector<8x128xf32> to vector<8x128xbf16>
    %c0_24 = arith.constant 0 : index
    %c768 = arith.constant 768 : index
    %51 = vector.load %arg4[%c0_24, %c768] : memref<8x1152xbf16, #tpu.memory_space<vmem>>, vector<8x128xbf16>
    tpu.vector_store %arg4[%c0_24, %c768], %44 {strides = array<i32>} : memref<8x1152xbf16, #tpu.memory_space<vmem>>, vector<8x128xbf16>,
    %c0_25 = arith.constant 0 : index
    %c896 = arith.constant 896 : index
    %52 = vector.load %arg4[%c0_25, %c896] : memref<8x1152xbf16, #tpu.memory_space<vmem>>, vector<8x128xbf16>
    tpu.vector_store %arg4[%c0_25, %c896], %47 {strides = array<i32>} : memref<8x1152xbf16, #tpu.memory_space<vmem>>, vector<8x128xbf16>,
    %c0_26 = arith.constant 0 : index
    %c1024 = arith.constant 1024 : index
    %53 = vector.load %arg4[%c0_26, %c1024] : memref<8x1152xbf16, #tpu.memory_space<vmem>>, vector<8x128xbf16>
    tpu.vector_store %arg4[%c0_26, %c1024], %50 {strides = array<i32>} : memref<8x1152xbf16, #tpu.memory_space<vmem>>, vector<8x128xbf16>,
    %c0_27 = arith.constant 0 : index
    %c0_28 = arith.constant 0 : index
    %54 = vector.load %arg4[%c0_27, %c0_28] : memref<8x1152xbf16, #tpu.memory_space<vmem>>, vector<8x1152xbf16>
    %c0_29 = arith.constant 0 : index
    %c0_30 = arith.constant 0 : index
    %55 = vector.load %arg2[%c0_29, %c0_30] : memref<1152x384xbf16, #tpu.memory_space<vmem>>, vector<1152x384xbf16>
    %cst_31 = arith.constant dense<0.000000e+00> : vector<8x384xf32>
    %56 = tpu.matmul %54, %55, %cst_31 {dimension_numbers = #tpu.dot_dimension_numbers<[1], [0], [0], [1], [0, 0, 1, 1], [], []>} : vector<8x1152xbf16>, vector<1152x384xbf16>, vector<8x384xf32> -> vector<8x384xf32>
    %c0_32 = arith.constant 0 : index
    %c0_33 = arith.constant 0 : index
    %57 = vector.load %arg3[%c0_32, %c0_33] : memref<8x384xf32, #tpu.memory_space<vmem>>, vector<8x384xf32>
    tpu.vector_store %arg3[%c0_32, %c0_33], %56 {strides = array<i32>} : memref<8x384xf32, #tpu.memory_space<vmem>>, vector<8x384xf32>,
    return
  }
  func.func @transform_0(%arg0: i32) -> (i32, i32, i32, i32) {
    %c0_i32 = arith.constant 0 : i32
    %c0_i32_0 = arith.constant 0 : i32
    %c0_i32_1 = arith.constant 0 : i32
    %c0_i32_2 = arith.constant 0 : i32
    return %c0_i32, %c0_i32_0, %arg0, %c0_i32_1 : i32, i32, i32, i32
  }
  func.func @transform_1(%arg0: i32) -> (i32, i32) {
    %c0_i32 = arith.constant 0 : i32
    %c0_i32_0 = arith.constant 0 : i32
    %c0_i32_1 = arith.constant 0 : i32
    return %c0_i32, %c0_i32_0 : i32, i32
  }
  func.func @transform_2(%arg0: i32) -> (i32, i32) {
    %c0_i32 = arith.constant 0 : i32
    %c0_i32_0 = arith.constant 0 : i32
    return %arg0, %c0_i32 : i32, i32
  }
}

</mosaic_0001>

<llo_original>
// kernel: postprocess.1
$region0: #{postprocess.1}
  #allocation0 [shape = 'u32[]', space=smem, size = 0x4, offset = 0x4, fixed_abs, tag = 'smem constant byte address 0x4 - core index']
  #allocation1 [shape = 'u32[144,128]{1,0:T(1,128)}', space=vmem, size = 0x12000, scoped, tag = 'internal scratch']
  #allocation2 [shape = 'bf16[8,1152]{1,0:T(8,128)(2,1)}', space=vmem, size = 0x4800, scoped, tag = 'scratch operand']
  %s0 = inlined_call_operand.vmem [shape: f32[1,3,8,128], index: 0, kind: input, shape index: {}]
  %s1 = inlined_call_operand.vmem [shape: bf16[1152,384], index: 1, kind: input, shape index: {}]
  %s2 = inlined_call_operand.vmem [shape: f32[8,384], index: 2, kind: output, shape index: {}]
  %s3 = sld [smem:[#allocation0]]
  $region18: #{postprocess.1} parent=0
    _
  %s5 = ssub.s32 1, %s3
  %s6 = scalar_select 0, %s5, %s3
  // Predicated region
  $region2: #{postprocess.1} parent=0 // pred_check
    _
  $region3: #{postprocess.1} parent=0 // pred_check_branch
    %8 = sbr.rel (0) target = $region5
  $region4: #{postprocess.1} parent=0 // pred_region
    _
  $region5: #{postprocess.1} parent=0 // pred_fallthru
    _
  // Predicated region
  $region6: #{postprocess.1} parent=0 // pred_check
    _
  $region7: #{postprocess.1} parent=0 // pred_check_branch
    %10 = sbr.rel (0) target = $region9
  $region8: #{postprocess.1} parent=0 // pred_region
    _
  $region9: #{postprocess.1} parent=0 // pred_fallthru
    _
  %v12 = vld [vmem:[%s0] sm:$0xff]
  %v13 = vmax.f32 %v12, 0.0
  %v14 = vmin.f32 %v13, 1.0
  %v15 = vmul.f32 %v14, 255.0
  %v16 = vpack.c.bf16 %v15, %v15
  %v17 = vunpack.c.l.bf16 %v16
  %v18 = vsub.f32 %v15, %v17
  %v19 = vpack.c.bf16 %v18, %v18
  %v20 = vunpack.c.l.bf16 %v19
  %v21 = vsub.f32 %v18, %v20
  %v22 = vpack.c.bf16 %v21, %v21
  %23 = vst [vmem:[#allocation2] sm:$0xf] %v16
  %24 = vst [vmem:[#allocation2 + $0x4] sm:$0xf] %v19
  %25 = vst [vmem:[#allocation2 + $0x8] sm:$0xf] %v22
  %s26 = scalar_lea.vmem %s0, 8
  %v27 = vld [vmem:[%s26] sm:$0xff]
  %v28 = vmax.f32 %v27, 0.0
  %v29 = vmin.f32 %v28, 1.0
  %v30 = vmul.f32 %v29, 255.0
  %v31 = vpack.c.bf16 %v30, %v30
  %v32 = vunpack.c.l.bf16 %v31
  %v33 = vsub.f32 %v30, %v32
  %v34 = vpack.c.bf16 %v33, %v33
  %v35 = vunpack.c.l.bf16 %v34
  %v36 = vsub.f32 %v33, %v35
  %v37 = vpack.c.bf16 %v36, %v36
  %38 = vst [vmem:[#allocation2 + $0xc] sm:$0xf] %v31
  %39 = vst [vmem:[#allocation2 + $0x10] sm:$0xf] %v34
  %40 = vst [vmem:[#allocation2 + $0x14] sm:$0xf] %v37
  %s41 = scalar_lea.vmem %s0, 16
  %v42 = vld [vmem:[%s41] sm:$0xff]
  %v43 = vmax.f32 %v42, 0.0
  %v44 = vmin.f32 %v43, 1.0
  %v45 = vmul.f32 %v44, 255.0
  %v46 = vpack.c.bf16 %v45, %v45
  %v47 = vunpack.c.l.bf16 %v46
  %v48 = vsub.f32 %v45, %v47
  %v49 = vpack.c.bf16 %v48, %v48
  %v50 = vunpack.c.l.bf16 %v49
  %v51 = vsub.f32 %v48, %v50
  %v52 = vpack.c.bf16 %v51, %v51
  %53 = vst [vmem:[#allocation2 + $0x18] sm:$0xf] %v46
  %54 = vst [vmem:[#allocation2 + $0x1c] sm:$0xf] %v49
  %55 = vst [vmem:[#allocation2 + $0x20] sm:$0xf] %v52
  %v56 = vld [vmem:[#allocation2] sm:$0xff]
  %v57 = vld [vmem:[#allocation2 + $0x8] sm:$0xff]
  %v58 = vld [vmem:[#allocation2 + $0x10] sm:$0xff]
  %v59 = vld [vmem:[#allocation2 + $0x18] sm:$0xff]
  %v60 = vld [vmem:[#allocation2 + $0x20] sm:$0xf]
  %v61 = vld [vmem:[%s1] sm:$0xff]
  %v62 = vld [vmem:[%s1 + $0x8] sm:$0xf]
  %v63 = vld [vmem:[%s1 + $0xc] sm:$0xff]
  %v64 = vld [vmem:[%s1 + $0x14] sm:$0xf]
  %v65 = vld [vmem:[%s1 + $0x18] sm:$0xff]
  %v66 = vld [vmem:[%s1 + $0x20] sm:$0xf]
  %v67 = vld [vmem:[%s1 + $0x24] sm:$0xff]
  %v68 = vld [vmem:[%s1 + $0x2c] sm:$0xf]
  %v69 = vld [vmem:[%s1 + $0x30] sm:$0xff]
  %v70 = vld [vmem:[%s1 + $0x38] sm:$0xf]
  %v71 = vld [vmem:[%s1 + $0x3c] sm:$0xff]
  %v72 = vld [vmem:[%s1 + $0x44] sm:$0xf]
  %v73 = vld [vmem:[%s1 + $0x48] sm:$0xff]
  %v74 = vld [vmem:[%s1 + $0x50] sm:$0xf]
  %v75 = vld [vmem:[%s1 + $0x54] sm:$0xff]
  %v76 = vld [vmem:[%s1 + $0x5c] sm:$0xf]
  %v77 = vld [vmem:[%s1 + $0x60] sm:$0xff]
  %v78 = vld [vmem:[%s1 + $0x68] sm:$0xf]
  %v79 = vld [vmem:[%s1 + $0x6c] sm:$0xff]
  %v80 = vld [vmem:[%s1 + $0x74] sm:$0xf]
  %v81 = vld [vmem:[%s1 + $0x78] sm:$0xff]
  %v82 = vld [vmem:[%s1 + $0x80] sm:$0xf]
  %v83 = vld [vmem:[%s1 + $0x84] sm:$0xff]
  %v84 = vld [vmem:[%s1 + $0x8c] sm:$0xf]
  %v85 = vld [vmem:[%s1 + $0x90] sm:$0xff]
  %v86 = vld [vmem:[%s1 + $0x98] sm:$0xf]
  %v87 = vld [vmem:[%s1 + $0x9c] sm:$0xff]
  %v88 = vld [vmem:[%s1 + $0xa4] sm:$0xf]
  %v89 = vld [vmem:[%s1 + $0xa8] sm:$0xff]
  %v90 = vld [vmem:[%s1 + $0xb0] sm:$0xf]
  %v91 = vld [vmem:[%s1 + $0xb4] sm:$0xff]
  %v92 = vld [vmem:[%s1 + $0xbc] sm:$0xf]
  %v93 = vld [vmem:[%s1 + $0xc0] sm:$0xff]
  %v94 = vld [vmem:[%s1 + $0xc8] sm:$0xf]
  %v95 = vld [vmem:[%s1 + $0xcc] sm:$0xff]
  %v96 = vld [vmem:[%s1 + $0xd4] sm:$0xf]
  %v97 = vld [vmem:[%s1 + $0xd8] sm:$0xff]
  %v98 = vld [vmem:[%s1 + $0xe0] sm:$0xf]
  %v99 = vld [vmem:[%s1 + $0xe4] sm:$0xff]
  %v100 = vld [vmem:[%s1 + $0xec] sm:$0xf]
  %v101 = vld [vmem:[%s1 + $0xf0] sm:$0xff]
  %v102 = vld [vmem:[%s1 + $0xf8] sm:$0xf]
  %v103 = vld [vmem:[%s1 + $0xfc] sm:$0xff]
  %v104 = vld [vmem:[%s1 + $0x104] sm:$0xf]
  %v105 = vld [vmem:[%s1 + $0x108] sm:$0xff]
  %v106 = vld [vmem:[%s1 + $0x110] sm:$0xf]
  %v107 = vld [vmem:[%s1 + $0x114] sm:$0xff]
  %v108 = vld [vmem:[%s1 + $0x11c] sm:$0xf]
  %v109 = vld [vmem:[%s1 + $0x120] sm:$0xff]
  %v110 = vld [vmem:[%s1 + $0x128] sm:$0xf]
  %v111 = vld [vmem:[%s1 + $0x12c] sm:$0xff]
  %v112 = vld [vmem:[%s1 + $0x134] sm:$0xf]
  %v113 = vld [vmem:[%s1 + $0x138] sm:$0xff]
  %v114 = vld [vmem:[%s1 + $0x140] sm:$0xf]
  %v115 = vld [vmem:[%s1 + $0x144] sm:$0xff]
  %v116 = vld [vmem:[%s1 + $0x14c] sm:$0xf]
  %v117 = vld [vmem:[%s1 + $0x150] sm:$0xff]
  %v118 = vld [vmem:[%s1 + $0x158] sm:$0xf]
  %v119 = vld [vmem:[%s1 + $0x15c] sm:$0xff]
  %v120 = vld [vmem:[%s1 + $0x164] sm:$0xf]
  %v121 = vld [vmem:[%s1 + $0x168] sm:$0xff]
  %v122 = vld [vmem:[%s1 + $0x170] sm:$0xf]
  %v123 = vld [vmem:[%s1 + $0x174] sm:$0xff]
  %v124 = vld [vmem:[%s1 + $0x17c] sm:$0xf]
  %v125 = vld [vmem:[%s1 + $0x180] sm:$0xff]
  %v126 = vld [vmem:[%s1 + $0x188] sm:$0xf]
  %v127 = vld [vmem:[%s1 + $0x18c] sm:$0xff]
  %v128 = vld [vmem:[%s1 + $0x194] sm:$0xf]
  %v129 = vld [vmem:[%s1 + $0x198] sm:$0xff]
  %v130 = vld [vmem:[%s1 + $0x1a0] sm:$0xf]
  %v131 = vld [vmem:[%s1 + $0x1a4] sm:$0xff]
  %v132 = vld [vmem:[%s1 + $0x1ac] sm:$0xf]
  %v133 = vld [vmem:[%s1 + $0x1b0] sm:$0xff]
  %v134 = vld [vmem:[%s1 + $0x1b8] sm:$0xf]
  %v135 = vld [vmem:[%s1 + $0x1bc] sm:$0xff]
  %v136 = vld [vmem:[%s1 + $0x1c4] sm:$0xf]
  %v137 = vld [vmem:[%s1 + $0x1c8] sm:$0xff]
  %v138 = vld [vmem:[%s1 + $0x1d0] sm:$0xf]
  %v139 = vld [vmem:[%s1 + $0x1d4] sm:$0xff]
  %v140 = vld [vmem:[%s1 + $0x1dc] sm:$0xf]
  %v141 = vld [vmem:[%s1 + $0x1e0] sm:$0xff]
  %v142 = vld [vmem:[%s1 + $0x1e8] sm:$0xf]
  %v143 = vld [vmem:[%s1 + $0x1ec] sm:$0xff]
  %v144 = vld [vmem:[%s1 + $0x1f4] sm:$0xf]
  %v145 = vld [vmem:[%s1 + $0x1f8] sm:$0xff]
  %v146 = vld [vmem:[%s1 + $0x200] sm:$0xf]
  %v147 = vld [vmem:[%s1 + $0x204] sm:$0xff]
  %v148 = vld [vmem:[%s1 + $0x20c] sm:$0xf]
  %v149 = vld [vmem:[%s1 + $0x210] sm:$0xff]
  %v150 = vld [vmem:[%s1 + $0x218] sm:$0xf]
  %v151 = vld [vmem:[%s1 + $0x21c] sm:$0xff]
  %v152 = vld [vmem:[%s1 + $0x224] sm:$0xf]
  %v153 = vld [vmem:[%s1 + $0x228] sm:$0xff]
  %v154 = vld [vmem:[%s1 + $0x230] sm:$0xf]
  %v155 = vld [vmem:[%s1 + $0x234] sm:$0xff]
  %v156 = vld [vmem:[%s1 + $0x23c] sm:$0xf]
  %v157 = vld [vmem:[%s1 + $0x240] sm:$0xff]
  %v158 = vld [vmem:[%s1 + $0x248] sm:$0xf]
  %v159 = vld [vmem:[%s1 + $0x24c] sm:$0xff]
  %v160 = vld [vmem:[%s1 + $0x254] sm:$0xf]
  %v161 = vld [vmem:[%s1 + $0x258] sm:$0xff]
  %v162 = vld [vmem:[%s1 + $0x260] sm:$0xf]
  %v163 = vld [vmem:[%s1 + $0x264] sm:$0xff]
  %v164 = vld [vmem:[%s1 + $0x26c] sm:$0xf]
  %v165 = vld [vmem:[%s1 + $0x270] sm:$0xff]
  %v166 = vld [vmem:[%s1 + $0x278] sm:$0xf]
  %v167 = vld [vmem:[%s1 + $0x27c] sm:$0xff]
  %v168 = vld [vmem:[%s1 + $0x284] sm:$0xf]
  %v169 = vld [vmem:[%s1 + $0x288] sm:$0xff]
  %v170 = vld [vmem:[%s1 + $0x290] sm:$0xf]
  %v171 = vld [vmem:[%s1 + $0x294] sm:$0xff]
  %v172 = vld [vmem:[%s1 + $0x29c] sm:$0xf]
  %v173 = vld [vmem:[%s1 + $0x2a0] sm:$0xff]
  %v174 = vld [vmem:[%s1 + $0x2a8] sm:$0xf]
  %v175 = vld [vmem:[%s1 + $0x2ac] sm:$0xff]
  %v176 = vld [vmem:[%s1 + $0x2b4] sm:$0xf]
  %v177 = vld [vmem:[%s1 + $0x2b8] sm:$0xff]
  %v178 = vld [vmem:[%s1 + $0x2c0] sm:$0xf]
  %v179 = vld [vmem:[%s1 + $0x2c4] sm:$0xff]
  %v180 = vld [vmem:[%s1 + $0x2cc] sm:$0xf]
  %v181 = vld [vmem:[%s1 + $0x2d0] sm:$0xff]
  %v182 = vld [vmem:[%s1 + $0x2d8] sm:$0xf]
  %v183 = vld [vmem:[%s1 + $0x2dc] sm:$0xff]
  %v184 = vld [vmem:[%s1 + $0x2e4] sm:$0xf]
  %v185 = vld [vmem:[%s1 + $0x2e8] sm:$0xff]
  %v186 = vld [vmem:[%s1 + $0x2f0] sm:$0xf]
  %v187 = vld [vmem:[%s1 + $0x2f4] sm:$0xff]
  %v188 = vld [vmem:[%s1 + $0x2fc] sm:$0xf]
  %v189 = vld [vmem:[%s1 + $0x300] sm:$0xff]
  %v190 = vld [vmem:[%s1 + $0x308] sm:$0xf]
  %v191 = vld [vmem:[%s1 + $0x30c] sm:$0xff]
  %v192 = vld [vmem:[%s1 + $0x314] sm:$0xf]
  %v193 = vld [vmem:[%s1 + $0x318] sm:$0xff]
  %v194 = vld [vmem:[%s1 + $0x320] sm:$0xf]
  %v195 = vld [vmem:[%s1 + $0x324] sm:$0xff]
  %v196 = vld [vmem:[%s1 + $0x32c] sm:$0xf]
  %v197 = vld [vmem:[%s1 + $0x330] sm:$0xff]
  %v198 = vld [vmem:[%s1 + $0x338] sm:$0xf]
  %v199 = vld [vmem:[%s1 + $0x33c] sm:$0xff]
  %v200 = vld [vmem:[%s1 + $0x344] sm:$0xf]
  %v201 = vld [vmem:[%s1 + $0x348] sm:$0xff]
  %v202 = vld [vmem:[%s1 + $0x350] sm:$0xf]
  %v203 = vld [vmem:[%s1 + $0x354] sm:$0xff]
  %v204 = vld [vmem:[%s1 + $0x35c] sm:$0xf]
  %v205 = vld [vmem:[%s1 + $0x360] sm:$0xff]
  %v206 = vld [vmem:[%s1 + $0x368] sm:$0xf]
  %v207 = vld [vmem:[%s1 + $0x36c] sm:$0xff]
  %v208 = vld [vmem:[%s1 + $0x374] sm:$0xf]
  %v209 = vld [vmem:[%s1 + $0x378] sm:$0xff]
  %v210 = vld [vmem:[%s1 + $0x380] sm:$0xf]
  %v211 = vld [vmem:[%s1 + $0x384] sm:$0xff]
  %v212 = vld [vmem:[%s1 + $0x38c] sm:$0xf]
  %v213 = vld [vmem:[%s1 + $0x390] sm:$0xff]
  %v214 = vld [vmem:[%s1 + $0x398] sm:$0xf]
  %v215 = vld [vmem:[%s1 + $0x39c] sm:$0xff]
  %v216 = vld [vmem:[%s1 + $0x3a4] sm:$0xf]
  %v217 = vld [vmem:[%s1 + $0x3a8] sm:$0xff]
  %v218 = vld [vmem:[%s1 + $0x3b0] sm:$0xf]
  %v219 = vld [vmem:[%s1 + $0x3b4] sm:$0xff]
  %v220 = vld [vmem:[%s1 + $0x3bc] sm:$0xf]
  %v221 = vld [vmem:[%s1 + $0x3c0] sm:$0xff]
  %v222 = vld [vmem:[%s1 + $0x3c8] sm:$0xf]
  %v223 = vld [vmem:[%s1 + $0x3cc] sm:$0xff]
  %v224 = vld [vmem:[%s1 + $0x3d4] sm:$0xf]
  %v225 = vld [vmem:[%s1 + $0x3d8] sm:$0xff]
  %v226 = vld [vmem:[%s1 + $0x3e0] sm:$0xf]
  %v227 = vld [vmem:[%s1 + $0x3e4] sm:$0xff]
  %v228 = vld [vmem:[%s1 + $0x3ec] sm:$0xf]
  %v229 = vld [vmem:[%s1 + $0x3f0] sm:$0xff]
  %v230 = vld [vmem:[%s1 + $0x3f8] sm:$0xf]
  %v231 = vld [vmem:[%s1 + $0x3fc] sm:$0xff]
  %v232 = vld [vmem:[%s1 + $0x404] sm:$0xf]
  %v233 = vld [vmem:[%s1 + $0x408] sm:$0xff]
  %v234 = vld [vmem:[%s1 + $0x410] sm:$0xf]
  %v235 = vld [vmem:[%s1 + $0x414] sm:$0xff]
  %v236 = vld [vmem:[%s1 + $0x41c] sm:$0xf]
  %v237 = vld [vmem:[%s1 + $0x420] sm:$0xff]
  %v238 = vld [vmem:[%s1 + $0x428] sm:$0xf]
  %v239 = vld [vmem:[%s1 + $0x42c] sm:$0xff]
  %v240 = vld [vmem:[%s1 + $0x434] sm:$0xf]
  %v241 = vld [vmem:[%s1 + $0x438] sm:$0xff]
  %v242 = vld [vmem:[%s1 + $0x440] sm:$0xf]
  %v243 = vld [vmem:[%s1 + $0x444] sm:$0xff]
  %v244 = vld [vmem:[%s1 + $0x44c] sm:$0xf]
  %v245 = vld [vmem:[%s1 + $0x450] sm:$0xff]
  %v246 = vld [vmem:[%s1 + $0x458] sm:$0xf]
  %v247 = vld [vmem:[%s1 + $0x45c] sm:$0xff]
  %v248 = vld [vmem:[%s1 + $0x464] sm:$0xf]
  %v249 = vld [vmem:[%s1 + $0x468] sm:$0xff]
  %v250 = vld [vmem:[%s1 + $0x470] sm:$0xf]
  %v251 = vld [vmem:[%s1 + $0x474] sm:$0xff]
  %v252 = vld [vmem:[%s1 + $0x47c] sm:$0xf]
  %v253 = vld [vmem:[%s1 + $0x480] sm:$0xff]
  %v254 = vld [vmem:[%s1 + $0x488] sm:$0xf]
  %v255 = vld [vmem:[%s1 + $0x48c] sm:$0xff]
  %v256 = vld [vmem:[%s1 + $0x494] sm:$0xf]
  %v257 = vld [vmem:[%s1 + $0x498] sm:$0xff]
  %v258 = vld [vmem:[%s1 + $0x4a0] sm:$0xf]
  %v259 = vld [vmem:[%s1 + $0x4a4] sm:$0xff]
  %v260 = vld [vmem:[%s1 + $0x4ac] sm:$0xf]
  %v261 = vld [vmem:[%s1 + $0x4b0] sm:$0xff]
  %v262 = vld [vmem:[%s1 + $0x4b8] sm:$0xf]
  %v263 = vld [vmem:[%s1 + $0x4bc] sm:$0xff]
  %v264 = vld [vmem:[%s1 + $0x4c4] sm:$0xf]
  %v265 = vld [vmem:[%s1 + $0x4c8] sm:$0xff]
  %v266 = vld [vmem:[%s1 + $0x4d0] sm:$0xf]
  %v267 = vld [vmem:[%s1 + $0x4d4] sm:$0xff]
  %v268 = vld [vmem:[%s1 + $0x4dc] sm:$0xf]
  %v269 = vld [vmem:[%s1 + $0x4e0] sm:$0xff]
  %v270 = vld [vmem:[%s1 + $0x4e8] sm:$0xf]
  %v271 = vld [vmem:[%s1 + $0x4ec] sm:$0xff]
  %v272 = vld [vmem:[%s1 + $0x4f4] sm:$0xf]
  %v273 = vld [vmem:[%s1 + $0x4f8] sm:$0xff]
  %v274 = vld [vmem:[%s1 + $0x500] sm:$0xf]
  %v275 = vld [vmem:[%s1 + $0x504] sm:$0xff]
  %v276 = vld [vmem:[%s1 + $0x50c] sm:$0xf]
  %v277 = vld [vmem:[%s1 + $0x510] sm:$0xff]
  %v278 = vld [vmem:[%s1 + $0x518] sm:$0xf]
  %v279 = vld [vmem:[%s1 + $0x51c] sm:$0xff]
  %v280 = vld [vmem:[%s1 + $0x524] sm:$0xf]
  %v281 = vld [vmem:[%s1 + $0x528] sm:$0xff]
  %v282 = vld [vmem:[%s1 + $0x530] sm:$0xf]
  %v283 = vld [vmem:[%s1 + $0x534] sm:$0xff]
  %v284 = vld [vmem:[%s1 + $0x53c] sm:$0xf]
  %v285 = vld [vmem:[%s1 + $0x540] sm:$0xff]
  %v286 = vld [vmem:[%s1 + $0x548] sm:$0xf]
  %v287 = vld [vmem:[%s1 + $0x54c] sm:$0xff]
  %v288 = vld [vmem:[%s1 + $0x554] sm:$0xf]
  %v289 = vld [vmem:[%s1 + $0x558] sm:$0xff]
  %v290 = vld [vmem:[%s1 + $0x560] sm:$0xf]
  %v291 = vld [vmem:[%s1 + $0x564] sm:$0xff]
  %v292 = vld [vmem:[%s1 + $0x56c] sm:$0xf]
  %v293 = vld [vmem:[%s1 + $0x570] sm:$0xff]
  %v294 = vld [vmem:[%s1 + $0x578] sm:$0xf]
  %v295 = vld [vmem:[%s1 + $0x57c] sm:$0xff]
  %v296 = vld [vmem:[%s1 + $0x584] sm:$0xf]
  %v297 = vld [vmem:[%s1 + $0x588] sm:$0xff]
  %v298 = vld [vmem:[%s1 + $0x590] sm:$0xf]
  %v299 = vld [vmem:[%s1 + $0x594] sm:$0xff]
  %v300 = vld [vmem:[%s1 + $0x59c] sm:$0xf]
  %v301 = vld [vmem:[%s1 + $0x5a0] sm:$0xff]
  %v302 = vld [vmem:[%s1 + $0x5a8] sm:$0xf]
  %v303 = vld [vmem:[%s1 + $0x5ac] sm:$0xff]
  %v304 = vld [vmem:[%s1 + $0x5b4] sm:$0xf]
  %v305 = vld [vmem:[%s1 + $0x5b8] sm:$0xff]
  %v306 = vld [vmem:[%s1 + $0x5c0] sm:$0xf]
  %v307 = vld [vmem:[%s1 + $0x5c4] sm:$0xff]
  %v308 = vld [vmem:[%s1 + $0x5cc] sm:$0xf]
  %v309 = vld [vmem:[%s1 + $0x5d0] sm:$0xff]
  %v310 = vld [vmem:[%s1 + $0x5d8] sm:$0xf]
  %v311 = vld [vmem:[%s1 + $0x5dc] sm:$0xff]
  %v312 = vld [vmem:[%s1 + $0x5e4] sm:$0xf]
  %v313 = vld [vmem:[%s1 + $0x5e8] sm:$0xff]
  %v314 = vld [vmem:[%s1 + $0x5f0] sm:$0xf]
  %v315 = vld [vmem:[%s1 + $0x5f4] sm:$0xff]
  %v316 = vld [vmem:[%s1 + $0x5fc] sm:$0xf]
  %v317 = vld [vmem:[%s1 + $0x600] sm:$0xff]
  %v318 = vld [vmem:[%s1 + $0x608] sm:$0xf]
  %v319 = vld [vmem:[%s1 + $0x60c] sm:$0xff]
  %v320 = vld [vmem:[%s1 + $0x614] sm:$0xf]
  %v321 = vld [vmem:[%s1 + $0x618] sm:$0xff]
  %v322 = vld [vmem:[%s1 + $0x620] sm:$0xf]
  %v323 = vld [vmem:[%s1 + $0x624] sm:$0xff]
  %v324 = vld [vmem:[%s1 + $0x62c] sm:$0xf]
  %v325 = vld [vmem:[%s1 + $0x630] sm:$0xff]
  %v326 = vld [vmem:[%s1 + $0x638] sm:$0xf]
  %v327 = vld [vmem:[%s1 + $0x63c] sm:$0xff]
  %v328 = vld [vmem:[%s1 + $0x644] sm:$0xf]
  %v329 = vld [vmem:[%s1 + $0x648] sm:$0xff]
  %v330 = vld [vmem:[%s1 + $0x650] sm:$0xf]
  %v331 = vld [vmem:[%s1 + $0x654] sm:$0xff]
  %v332 = vld [vmem:[%s1 + $0x65c] sm:$0xf]
  %v333 = vld [vmem:[%s1 + $0x660] sm:$0xff]
  %v334 = vld [vmem:[%s1 + $0x668] sm:$0xf]
  %v335 = vld [vmem:[%s1 + $0x66c] sm:$0xff]
  %v336 = vld [vmem:[%s1 + $0x674] sm:$0xf]
  %v337 = vld [vmem:[%s1 + $0x678] sm:$0xff]
  %v338 = vld [vmem:[%s1 + $0x680] sm:$0xf]
  %v339 = vld [vmem:[%s1 + $0x684] sm:$0xff]
  %v340 = vld [vmem:[%s1 + $0x68c] sm:$0xf]
  %v341 = vld [vmem:[%s1 + $0x690] sm:$0xff]
  %v342 = vld [vmem:[%s1 + $0x698] sm:$0xf]
  %v343 = vld [vmem:[%s1 + $0x69c] sm:$0xff]
  %v344 = vld [vmem:[%s1 + $0x6a4] sm:$0xf]
  %v345 = vld [vmem:[%s1 + $0x6a8] sm:$0xff]
  %v346 = vld [vmem:[%s1 + $0x6b0] sm:$0xf]
  %v347 = vld [vmem:[%s1 + $0x6b4] sm:$0xff]
  %v348 = vld [vmem:[%s1 + $0x6bc] sm:$0xf]
  %v354 = vunpack.c.l.b16 %v56
  %v355 = vunpack.c.h.b16 %v56
  %v356 = vunpack.c.l.b16 %v57
  %v357 = vunpack.c.h.b16 %v57
  %v358 = vunpack.c.l.b16 %v58
  %v359 = vunpack.c.h.b16 %v58
  %v360 = vunpack.c.l.b16 %v59
  %v361 = vunpack.c.h.b16 %v59
  %v362 = vunpack.c.l.b16 %v60
  %v363 = vpack.c.b16 %v354, %v354
  %v364 = vpack.c.b16 %v355, %v355
  %v365 = vpack.c.b16 %v356, %v356
  %v366 = vpack.c.b16 %v357, %v357
  %v367 = vpack.c.b16 %v358, %v358
  %v368 = vpack.c.b16 %v359, %v359
  %v369 = vpack.c.b16 %v360, %v360
  %v370 = vpack.c.b16 %v361, %v361
  %v371 = vpack.c.b16 %v362, %v362
  %v669 = vunpack.c.l.b16 %v61
  %v670 = vunpack.c.h.b16 %v61
  %v671 = vunpack.c.l.b16 %v62
  %v672 = vunpack.c.l.b16 %v63
  %v673 = vunpack.c.h.b16 %v63
  %v674 = vunpack.c.l.b16 %v64
  %v675 = vunpack.c.l.b16 %v65
  %v676 = vunpack.c.h.b16 %v65
  %v677 = vunpack.c.l.b16 %v66
  %v678 = vunpack.c.l.b16 %v67
  %v679 = vunpack.c.h.b16 %v67
  %v680 = vunpack.c.l.b16 %v68
  %v681 = vunpack.c.l.b16 %v69
  %v682 = vunpack.c.h.b16 %v69
  %v683 = vunpack.c.l.b16 %v70
  %v684 = vunpack.c.l.b16 %v71
  %v685 = vunpack.c.h.b16 %v71
  %v686 = vunpack.c.l.b16 %v72
  %v687 = vunpack.c.l.b16 %v73
  %v688 = vunpack.c.h.b16 %v73
  %v689 = vunpack.c.l.b16 %v74
  %v690 = vunpack.c.l.b16 %v75
  %v691 = vunpack.c.h.b16 %v75
  %v692 = vunpack.c.l.b16 %v76
  %v693 = vunpack.c.l.b16 %v77
  %v694 = vunpack.c.h.b16 %v77
  %v695 = vunpack.c.l.b16 %v78
  %v696 = vunpack.c.l.b16 %v79
  %v697 = vunpack.c.h.b16 %v79
  %v698 = vunpack.c.l.b16 %v80
  %v699 = vunpack.c.l.b16 %v81
  %v700 = vunpack.c.h.b16 %v81
  %v701 = vunpack.c.l.b16 %v82
  %v702 = vunpack.c.l.b16 %v83
  %v703 = vunpack.c.h.b16 %v83
  %v704 = vunpack.c.l.b16 %v84
  %v705 = vunpack.c.l.b16 %v85
  %v706 = vunpack.c.h.b16 %v85
  %v707 = vunpack.c.l.b16 %v86
  %v708 = vunpack.c.l.b16 %v87
  %v709 = vunpack.c.h.b16 %v87
  %v710 = vunpack.c.l.b16 %v88
  %v711 = vunpack.c.l.b16 %v89
  %v712 = vunpack.c.h.b16 %v89
  %v713 = vunpack.c.l.b16 %v90
  %v714 = vunpack.c.l.b16 %v91
  %v715 = vunpack.c.h.b16 %v91
  %v716 = vunpack.c.l.b16 %v92
  %v717 = vunpack.c.l.b16 %v93
  %v718 = vunpack.c.h.b16 %v93
  %v719 = vunpack.c.l.b16 %v94
  %v720 = vunpack.c.l.b16 %v95
  %v721 = vunpack.c.h.b16 %v95
  %v722 = vunpack.c.l.b16 %v96
  %v723 = vunpack.c.l.b16 %v97
  %v724 = vunpack.c.h.b16 %v97
  %v725 = vunpack.c.l.b16 %v98
  %v726 = vunpack.c.l.b16 %v99
  %v727 = vunpack.c.h.b16 %v99
  %v728 = vunpack.c.l.b16 %v100
  %v729 = vunpack.c.l.b16 %v101
  %v730 = vunpack.c.h.b16 %v101
  %v731 = vunpack.c.l.b16 %v102
  %v732 = vunpack.c.l.b16 %v103
  %v733 = vunpack.c.h.b16 %v103
  %v734 = vunpack.c.l.b16 %v104
  %v735 = vunpack.c.l.b16 %v105
  %v736 = vunpack.c.h.b16 %v105
  %v737 = vunpack.c.l.b16 %v106
  %v738 = vunpack.c.l.b16 %v107
  %v739 = vunpack.c.h.b16 %v107
  %v740 = vunpack.c.l.b16 %v108
  %v741 = vunpack.c.l.b16 %v109
  %v742 = vunpack.c.h.b16 %v109
  %v743 = vunpack.c.l.b16 %v110
  %v744 = vunpack.c.l.b16 %v111
  %v745 = vunpack.c.h.b16 %v111
  %v746 = vunpack.c.l.b16 %v112
  %v747 = vunpack.c.l.b16 %v113
  %v748 = vunpack.c.h.b16 %v113
  %v749 = vunpack.c.l.b16 %v114
  %v750 = vunpack.c.l.b16 %v115
  %v751 = vunpack.c.h.b16 %v115
  %v752 = vunpack.c.l.b16 %v116
  %v753 = vunpack.c.l.b16 %v117
  %v754 = vunpack.c.h.b16 %v117
  %v755 = vunpack.c.l.b16 %v118
  %v756 = vunpack.c.l.b16 %v119
  %v757 = vunpack.c.h.b16 %v119
  %v758 = vunpack.c.l.b16 %v120
  %v759 = vunpack.c.l.b16 %v121
  %v760 = vunpack.c.h.b16 %v121
  %v761 = vunpack.c.l.b16 %v122
  %v762 = vunpack.c.l.b16 %v123
  %v763 = vunpack.c.h.b16 %v123
  %v764 = vunpack.c.l.b16 %v124
  %v765 = vunpack.c.l.b16 %v125
  %v766 = vunpack.c.h.b16 %v125
  %v767 = vunpack.c.l.b16 %v126
  %v768 = vunpack.c.l.b16 %v127
  %v769 = vunpack.c.h.b16 %v127
  %v770 = vunpack.c.l.b16 %v128
  %v771 = vunpack.c.l.b16 %v129
  %v772 = vunpack.c.h.b16 %v129
  %v773 = vunpack.c.l.b16 %v130
  %v774 = vunpack.c.l.b16 %v131
  %v775 = vunpack.c.h.b16 %v131
  %v776 = vunpack.c.l.b16 %v132
  %v777 = vunpack.c.l.b16 %v133
  %v778 = vunpack.c.h.b16 %v133
  %v779 = vunpack.c.l.b16 %v134
  %v780 = vunpack.c.l.b16 %v135
  %v781 = vunpack.c.h.b16 %v135
  %v782 = vunpack.c.l.b16 %v136
  %v783 = vunpack.c.l.b16 %v137
  %v784 = vunpack.c.h.b16 %v137
  %v785 = vunpack.c.l.b16 %v138
  %v786 = vunpack.c.l.b16 %v139
  %v787 = vunpack.c.h.b16 %v139
  %v788 = vunpack.c.l.b16 %v140
  %v789 = vunpack.c.l.b16 %v141
  %v790 = vunpack.c.h.b16 %v141
  %v791 = vunpack.c.l.b16 %v142
  %v792 = vunpack.c.l.b16 %v143
  %v793 = vunpack.c.h.b16 %v143
  %v794 = vunpack.c.l.b16 %v144
  %v795 = vunpack.c.l.b16 %v145
  %v796 = vunpack.c.h.b16 %v145
  %v797 = vunpack.c.l.b16 %v146
  %v798 = vunpack.c.l.b16 %v147
  %v799 = vunpack.c.h.b16 %v147
  %v800 = vunpack.c.l.b16 %v148
  %v801 = vunpack.c.l.b16 %v149
  %v802 = vunpack.c.h.b16 %v149
  %v803 = vunpack.c.l.b16 %v150
  %v804 = vunpack.c.l.b16 %v151
  %v805 = vunpack.c.h.b16 %v151
  %v806 = vunpack.c.l.b16 %v152
  %v807 = vunpack.c.l.b16 %v153
  %v808 = vunpack.c.h.b16 %v153
  %v809 = vunpack.c.l.b16 %v154
  %v810 = vunpack.c.l.b16 %v155
  %v811 = vunpack.c.h.b16 %v155
  %v812 = vunpack.c.l.b16 %v156
  %v813 = vunpack.c.l.b16 %v157
  %v814 = vunpack.c.h.b16 %v157
  %v815 = vunpack.c.l.b16 %v158
  %v816 = vunpack.c.l.b16 %v159
  %v817 = vunpack.c.h.b16 %v159
  %v818 = vunpack.c.l.b16 %v160
  %v819 = vunpack.c.l.b16 %v161
  %v820 = vunpack.c.h.b16 %v161
  %v821 = vunpack.c.l.b16 %v162
  %v822 = vunpack.c.l.b16 %v163
  %v823 = vunpack.c.h.b16 %v163
  %v824 = vunpack.c.l.b16 %v164
  %v825 = vunpack.c.l.b16 %v165
  %v826 = vunpack.c.h.b16 %v165
  %v827 = vunpack.c.l.b16 %v166
  %v828 = vunpack.c.l.b16 %v167
  %v829 = vunpack.c.h.b16 %v167
  %v830 = vunpack.c.l.b16 %v168
  %v831 = vunpack.c.l.b16 %v169
  %v832 = vunpack.c.h.b16 %v169
  %v833 = vunpack.c.l.b16 %v170
  %v834 = vunpack.c.l.b16 %v171
  %v835 = vunpack.c.h.b16 %v171
  %v836 = vunpack.c.l.b16 %v172
  %v837 = vunpack.c.l.b16 %v173
  %v838 = vunpack.c.h.b16 %v173
  %v839 = vunpack.c.l.b16 %v174
  %v840 = vunpack.c.l.b16 %v175
  %v841 = vunpack.c.h.b16 %v175
  %v842 = vunpack.c.l.b16 %v176
  %v843 = vunpack.c.l.b16 %v177
  %v844 = vunpack.c.h.b16 %v177
  %v845 = vunpack.c.l.b16 %v178
  %v846 = vunpack.c.l.b16 %v179
  %v847 = vunpack.c.h.b16 %v179
  %v848 = vunpack.c.l.b16 %v180
  %v849 = vunpack.c.l.b16 %v181
  %v850 = vunpack.c.h.b16 %v181
  %v851 = vunpack.c.l.b16 %v182
  %v852 = vunpack.c.l.b16 %v183
  %v853 = vunpack.c.h.b16 %v183
  %v854 = vunpack.c.l.b16 %v184
  %v855 = vunpack.c.l.b16 %v185
  %v856 = vunpack.c.h.b16 %v185
  %v857 = vunpack.c.l.b16 %v186
  %v858 = vunpack.c.l.b16 %v187
  %v859 = vunpack.c.h.b16 %v187
  %v860 = vunpack.c.l.b16 %v188
  %v861 = vunpack.c.l.b16 %v189
  %v862 = vunpack.c.h.b16 %v189
  %v863 = vunpack.c.l.b16 %v190
  %v864 = vunpack.c.l.b16 %v191
  %v865 = vunpack.c.h.b16 %v191
  %v866 = vunpack.c.l.b16 %v192
  %v867 = vunpack.c.l.b16 %v193
  %v868 = vunpack.c.h.b16 %v193
  %v869 = vunpack.c.l.b16 %v194
  %v870 = vunpack.c.l.b16 %v195
  %v871 = vunpack.c.h.b16 %v195
  %v872 = vunpack.c.l.b16 %v196
  %v873 = vunpack.c.l.b16 %v197
  %v874 = vunpack.c.h.b16 %v197
  %v875 = vunpack.c.l.b16 %v198
  %v876 = vunpack.c.l.b16 %v199
  %v877 = vunpack.c.h.b16 %v199
  %v878 = vunpack.c.l.b16 %v200
  %v879 = vunpack.c.l.b16 %v201
  %v880 = vunpack.c.h.b16 %v201
  %v881 = vunpack.c.l.b16 %v202
  %v882 = vunpack.c.l.b16 %v203
  %v883 = vunpack.c.h.b16 %v203
  %v884 = vunpack.c.l.b16 %v204
  %v885 = vunpack.c.l.b16 %v205
  %v886 = vunpack.c.h.b16 %v205
  %v887 = vunpack.c.l.b16 %v206
  %v888 = vunpack.c.l.b16 %v207
  %v889 = vunpack.c.h.b16 %v207
  %v890 = vunpack.c.l.b16 %v208
  %v891 = vunpack.c.l.b16 %v209
  %v892 = vunpack.c.h.b16 %v209
  %v893 = vunpack.c.l.b16 %v210
  %v894 = vunpack.c.l.b16 %v211
  %v895 = vunpack.c.h.b16 %v211
  %v896 = vunpack.c.l.b16 %v212
  %v897 = vunpack.c.l.b16 %v213
  %v898 = vunpack.c.h.b16 %v213
  %v899 = vunpack.c.l.b16 %v214
  %v900 = vunpack.c.l.b16 %v215
  %v901 = vunpack.c.h.b16 %v215
  %v902 = vunpack.c.l.b16 %v216
  %v903 = vunpack.c.l.b16 %v217
  %v904 = vunpack.c.h.b16 %v217
  %v905 = vunpack.c.l.b16 %v218
  %v906 = vunpack.c.l.b16 %v219
  %v907 = vunpack.c.h.b16 %v219
  %v908 = vunpack.c.l.b16 %v220
  %v909 = vunpack.c.l.b16 %v221
  %v910 = vunpack.c.h.b16 %v221
  %v911 = vunpack.c.l.b16 %v222
  %v912 = vunpack.c.l.b16 %v223
  %v913 = vunpack.c.h.b16 %v223
  %v914 = vunpack.c.l.b16 %v224
  %v915 = vunpack.c.l.b16 %v225
  %v916 = vunpack.c.h.b16 %v225
  %v917 = vunpack.c.l.b16 %v226
  %v918 = vunpack.c.l.b16 %v227
  %v919 = vunpack.c.h.b16 %v227
  %v920 = vunpack.c.l.b16 %v228
  %v921 = vunpack.c.l.b16 %v229
  %v922 = vunpack.c.h.b16 %v229
  %v923 = vunpack.c.l.b16 %v230
  %v924 = vunpack.c.l.b16 %v231
  %v925 = vunpack.c.h.b16 %v231
  %v926 = vunpack.c.l.b16 %v232
  %v927 = vunpack.c.l.b16 %v233
  %v928 = vunpack.c.h.b16 %v233
  %v929 = vunpack.c.l.b16 %v234
  %v930 = vunpack.c.l.b16 %v235
  %v931 = vunpack.c.h.b16 %v235
  %v932 = vunpack.c.l.b16 %v236
  %v933 = vunpack.c.l.b16 %v237
  %v934 = vunpack.c.h.b16 %v237
  %v935 = vunpack.c.l.b16 %v238
  %v936 = vunpack.c.l.b16 %v239
  %v937 = vunpack.c.h.b16 %v239
  %v938 = vunpack.c.l.b16 %v240
  %v939 = vunpack.c.l.b16 %v241
  %v940 = vunpack.c.h.b16 %v241
  %v941 = vunpack.c.l.b16 %v242
  %v942 = vunpack.c.l.b16 %v243
  %v943 = vunpack.c.h.b16 %v243
  %v944 = vunpack.c.l.b16 %v244
  %v945 = vunpack.c.l.b16 %v245
  %v946 = vunpack.c.h.b16 %v245
  %v947 = vunpack.c.l.b16 %v246
  %v948 = vunpack.c.l.b16 %v247
  %v949 = vunpack.c.h.b16 %v247
  %v950 = vunpack.c.l.b16 %v248
  %v951 = vunpack.c.l.b16 %v249
  %v952 = vunpack.c.h.b16 %v249
  %v953 = vunpack.c.l.b16 %v250
  %v954 = vunpack.c.l.b16 %v251
  %v955 = vunpack.c.h.b16 %v251
  %v956 = vunpack.c.l.b16 %v252
  %v957 = vunpack.c.l.b16 %v253
  %v958 = vunpack.c.h.b16 %v253
  %v959 = vunpack.c.l.b16 %v254
  %v960 = vunpack.c.l.b16 %v255
  %v961 = vunpack.c.h.b16 %v255
  %v962 = vunpack.c.l.b16 %v256
  %v963 = vunpack.c.l.b16 %v257
  %v964 = vunpack.c.h.b16 %v257
  %v965 = vunpack.c.l.b16 %v258
  %v966 = vunpack.c.l.b16 %v259
  %v967 = vunpack.c.h.b16 %v259
  %v968 = vunpack.c.l.b16 %v260
  %v969 = vunpack.c.l.b16 %v261
  %v970 = vunpack.c.h.b16 %v261
  %v971 = vunpack.c.l.b16 %v262
  %v972 = vunpack.c.l.b16 %v263
  %v973 = vunpack.c.h.b16 %v263
  %v974 = vunpack.c.l.b16 %v264
  %v975 = vunpack.c.l.b16 %v265
  %v976 = vunpack.c.h.b16 %v265
  %v977 = vunpack.c.l.b16 %v266
  %v978 = vunpack.c.l.b16 %v267
  %v979 = vunpack.c.h.b16 %v267
  %v980 = vunpack.c.l.b16 %v268
  %v981 = vunpack.c.l.b16 %v269
  %v982 = vunpack.c.h.b16 %v269
  %v983 = vunpack.c.l.b16 %v270
  %v984 = vunpack.c.l.b16 %v271
  %v985 = vunpack.c.h.b16 %v271
  %v986 = vunpack.c.l.b16 %v272
  %v987 = vunpack.c.l.b16 %v273
  %v988 = vunpack.c.h.b16 %v273
  %v989 = vunpack.c.l.b16 %v274
  %v990 = vunpack.c.l.b16 %v275
  %v991 = vunpack.c.h.b16 %v275
  %v992 = vunpack.c.l.b16 %v276
  %v993 = vunpack.c.l.b16 %v277
  %v994 = vunpack.c.h.b16 %v277
  %v995 = vunpack.c.l.b16 %v278
  %v996 = vunpack.c.l.b16 %v279
  %v997 = vunpack.c.h.b16 %v279
  %v998 = vunpack.c.l.b16 %v280
  %v999 = vunpack.c.l.b16 %v281
  %v1000 = vunpack.c.h.b16 %v281
  %v1001 = vunpack.c.l.b16 %v282
  %v1002 = vunpack.c.l.b16 %v283
  %v1003 = vunpack.c.h.b16 %v283
  %v1004 = vunpack.c.l.b16 %v284
  %v1005 = vunpack.c.l.b16 %v285
  %v1006 = vunpack.c.h.b16 %v285
  %v1007 = vunpack.c.l.b16 %v286
  %v1008 = vunpack.c.l.b16 %v287
  %v1009 = vunpack.c.h.b16 %v287
  %v1010 = vunpack.c.l.b16 %v288
  %v1011 = vunpack.c.l.b16 %v289
  %v1012 = vunpack.c.h.b16 %v289
  %v1013 = vunpack.c.l.b16 %v290
  %v1014 = vunpack.c.l.b16 %v291
  %v1015 = vunpack.c.h.b16 %v291
  %v1016 = vunpack.c.l.b16 %v292
  %v1017 = vunpack.c.l.b16 %v293
  %v1018 = vunpack.c.h.b16 %v293
  %v1019 = vunpack.c.l.b16 %v294
  %v1020 = vunpack.c.l.b16 %v295
  %v1021 = vunpack.c.h.b16 %v295
  %v1022 = vunpack.c.l.b16 %v296
  %v1023 = vunpack.c.l.b16 %v297
  %v1024 = vunpack.c.h.b16 %v297
  %v1025 = vunpack.c.l.b16 %v298
  %v1026 = vunpack.c.l.b16 %v299
  %v1027 = vunpack.c.h.b16 %v299
  %v1028 = vunpack.c.l.b16 %v300
  %v1029 = vunpack.c.l.b16 %v301
  %v1030 = vunpack.c.h.b16 %v301
  %v1031 = vunpack.c.l.b16 %v302
  %v1032 = vunpack.c.l.b16 %v303
  %v1033 = vunpack.c.h.b16 %v303
  %v1034 = vunpack.c.l.b16 %v304
  %v1035 = vunpack.c.l.b16 %v305
  %v1036 = vunpack.c.h.b16 %v305
  %v1037 = vunpack.c.l.b16 %v306
  %v1038 = vunpack.c.l.b16 %v307
  %v1039 = vunpack.c.h.b16 %v307
  %v1040 = vunpack.c.l.b16 %v308
  %v1041 = vunpack.c.l.b16 %v309
  %v1042 = vunpack.c.h.b16 %v309
  %v1043 = vunpack.c.l.b16 %v310
  %v1044 = vunpack.c.l.b16 %v311
  %v1045 = vunpack.c.h.b16 %v311
  %v1046 = vunpack.c.l.b16 %v312
  %v1047 = vunpack.c.l.b16 %v313
  %v1048 = vunpack.c.h.b16 %v313
  %v1049 = vunpack.c.l.b16 %v314
  %v1050 = vunpack.c.l.b16 %v315
  %v1051 = vunpack.c.h.b16 %v315
  %v1052 = vunpack.c.l.b16 %v316
  %v1053 = vunpack.c.l.b16 %v317
  %v1054 = vunpack.c.h.b16 %v317
  %v1055 = vunpack.c.l.b16 %v318
  %v1056 = vunpack.c.l.b16 %v319
  %v1057 = vunpack.c.h.b16 %v319
  %v1058 = vunpack.c.l.b16 %v320
  %v1059 = vunpack.c.l.b16 %v321
  %v1060 = vunpack.c.h.b16 %v321
  %v1061 = vunpack.c.l.b16 %v322
  %v1062 = vunpack.c.l.b16 %v323
  %v1063 = vunpack.c.h.b16 %v323
  %v1064 = vunpack.c.l.b16 %v324
  %v1065 = vunpack.c.l.b16 %v325
  %v1066 = vunpack.c.h.b16 %v325
  %v1067 = vunpack.c.l.b16 %v326
  %v1068 = vunpack.c.l.b16 %v327
  %v1069 = vunpack.c.h.b16 %v327
  %v1070 = vunpack.c.l.b16 %v328
  %v1071 = vunpack.c.l.b16 %v329
  %v1072 = vunpack.c.h.b16 %v329
  %v1073 = vunpack.c.l.b16 %v330
  %v1074 = vunpack.c.l.b16 %v331
  %v1075 = vunpack.c.h.b16 %v331
  %v1076 = vunpack.c.l.b16 %v332
  %v1077 = vunpack.c.l.b16 %v333
  %v1078 = vunpack.c.h.b16 %v333
  %v1079 = vunpack.c.l.b16 %v334
  %v1080 = vunpack.c.l.b16 %v335
  %v1081 = vunpack.c.h.b16 %v335
  %v1082 = vunpack.c.l.b16 %v336
  %v1083 = vunpack.c.l.b16 %v337
  %v1084 = vunpack.c.h.b16 %v337
  %v1085 = vunpack.c.l.b16 %v338
  %v1086 = vunpack.c.l.b16 %v339
  %v1087 = vunpack.c.h.b16 %v339
  %v1088 = vunpack.c.l.b16 %v340
  %v1089 = vunpack.c.l.b16 %v341
  %v1090 = vunpack.c.h.b16 %v341
  %v1091 = vunpack.c.l.b16 %v342
  %v1092 = vunpack.c.l.b16 %v343
  %v1093 = vunpack.c.h.b16 %v343
  %v1094 = vunpack.c.l.b16 %v344
  %v1095 = vunpack.c.l.b16 %v345
  %v1096 = vunpack.c.h.b16 %v345
  %v1097 = vunpack.c.l.b16 %v346
  %v1098 = vunpack.c.l.b16 %v347
  %v1099 = vunpack.c.h.b16 %v347
  %v1100 = vunpack.c.l.b16 %v348
  %v1101 = vpack.c.b16 %v672, %v669
  %v1102 = vpack.c.b16 %v673, %v670
  %v1103 = vpack.c.b16 %v674, %v671
  %v1104 = vpack.c.b16 %v678, %v675
  %v1105 = vpack.c.b16 %v679, %v676
  %v1106 = vpack.c.b16 %v680, %v677
  %v1107 = vpack.c.b16 %v684, %v681
  %v1108 = vpack.c.b16 %v685, %v682
  %v1109 = vpack.c.b16 %v686, %v683
  %v1110 = vpack.c.b16 %v690, %v687
  %v1111 = vpack.c.b16 %v691, %v688
  %v1112 = vpack.c.b16 %v692, %v689
  %v1113 = vpack.c.b16 %v696, %v693
  %v1114 = vpack.c.b16 %v697, %v694
  %v1115 = vpack.c.b16 %v698, %v695
  %v1116 = vpack.c.b16 %v702, %v699
  %v1117 = vpack.c.b16 %v703, %v700
  %v1118 = vpack.c.b16 %v704, %v701
  %v1119 = vpack.c.b16 %v708, %v705
  %v1120 = vpack.c.b16 %v709, %v706
  %v1121 = vpack.c.b16 %v710, %v707
  %v1122 = vpack.c.b16 %v714, %v711
  %v1123 = vpack.c.b16 %v715, %v712
  %v1124 = vpack.c.b16 %v716, %v713
  %v1125 = vpack.c.b16 %v720, %v717
  %v1126 = vpack.c.b16 %v721, %v718
  %v1127 = vpack.c.b16 %v722, %v719
  %v1128 = vpack.c.b16 %v726, %v723
  %v1129 = vpack.c.b16 %v727, %v724
  %v1130 = vpack.c.b16 %v728, %v725
  %v1131 = vpack.c.b16 %v732, %v729
  %v1132 = vpack.c.b16 %v733, %v730
  %v1133 = vpack.c.b16 %v734, %v731
  %v1134 = vpack.c.b16 %v738, %v735
  %v1135 = vpack.c.b16 %v739, %v736
  %v1136 = vpack.c.b16 %v740, %v737
  %v1137 = vpack.c.b16 %v744, %v741
  %v1138 = vpack.c.b16 %v745, %v742
  %v1139 = vpack.c.b16 %v746, %v743
  %v1140 = vpack.c.b16 %v750, %v747
  %v1141 = vpack.c.b16 %v751, %v748
  %v1142 = vpack.c.b16 %v752, %v749
  %v1143 = vpack.c.b16 %v756, %v753
  %v1144 = vpack.c.b16 %v757, %v754
  %v1145 = vpack.c.b16 %v758, %v755
  %v1146 = vpack.c.b16 %v762, %v759
  %v1147 = vpack.c.b16 %v763, %v760
  %v1148 = vpack.c.b16 %v764, %v761
  %v1149 = vpack.c.b16 %v768, %v765
  %v1150 = vpack.c.b16 %v769, %v766
  %v1151 = vpack.c.b16 %v770, %v767
  %v1152 = vpack.c.b16 %v774, %v771
  %v1153 = vpack.c.b16 %v775, %v772
  %v1154 = vpack.c.b16 %v776, %v773
  %v1155 = vpack.c.b16 %v780, %v777
  %v1156 = vpack.c.b16 %v781, %v778
  %v1157 = vpack.c.b16 %v782, %v779
  %v1158 = vpack.c.b16 %v786, %v783
  %v1159 = vpack.c.b16 %v787, %v784
  %v1160 = vpack.c.b16 %v788, %v785
  %v1161 = vpack.c.b16 %v792, %v789
  %v1162 = vpack.c.b16 %v793, %v790
  %v1163 = vpack.c.b16 %v794, %v791
  %v1164 = vpack.c.b16 %v798, %v795
  %v1165 = vpack.c.b16 %v799, %v796
  %v1166 = vpack.c.b16 %v800, %v797
  %v1167 = vpack.c.b16 %v804, %v801
  %v1168 = vpack.c.b16 %v805, %v802
  %v1169 = vpack.c.b16 %v806, %v803
  %v1170 = vpack.c.b16 %v810, %v807
  %v1171 = vpack.c.b16 %v811, %v808
  %v1172 = vpack.c.b16 %v812, %v809
  %v1173 = vpack.c.b16 %v816, %v813
  %v1174 = vpack.c.b16 %v817, %v814
  %v1175 = vpack.c.b16 %v818, %v815
  %v1176 = vpack.c.b16 %v822, %v819
  %v1177 = vpack.c.b16 %v823, %v820
  %v1178 = vpack.c.b16 %v824, %v821
  %v1179 = vpack.c.b16 %v828, %v825
  %v1180 = vpack.c.b16 %v829, %v826
  %v1181 = vpack.c.b16 %v830, %v827
  %v1182 = vpack.c.b16 %v834, %v831
  %v1183 = vpack.c.b16 %v835, %v832
  %v1184 = vpack.c.b16 %v836, %v833
  %v1185 = vpack.c.b16 %v840, %v837
  %v1186 = vpack.c.b16 %v841, %v838
  %v1187 = vpack.c.b16 %v842, %v839
  %v1188 = vpack.c.b16 %v846, %v843
  %v1189 = vpack.c.b16 %v847, %v844
  %v1190 = vpack.c.b16 %v848, %v845
  %v1191 = vpack.c.b16 %v852, %v849
  %v1192 = vpack.c.b16 %v853, %v850
  %v1193 = vpack.c.b16 %v854, %v851
  %v1194 = vpack.c.b16 %v858, %v855
  %v1195 = vpack.c.b16 %v859, %v856
  %v1196 = vpack.c.b16 %v860, %v857
  %v1197 = vpack.c.b16 %v864, %v861
  %v1198 = vpack.c.b16 %v865, %v862
  %v1199 = vpack.c.b16 %v866, %v863
  %v1200 = vpack.c.b16 %v870, %v867
  %v1201 = vpack.c.b16 %v871, %v868
  %v1202 = vpack.c.b16 %v872, %v869
  %v1203 = vpack.c.b16 %v876, %v873
  %v1204 = vpack.c.b16 %v877, %v874
  %v1205 = vpack.c.b16 %v878, %v875
  %v1206 = vpack.c.b16 %v882, %v879
  %v1207 = vpack.c.b16 %v883, %v880
  %v1208 = vpack.c.b16 %v884, %v881
  %v1209 = vpack.c.b16 %v888, %v885
  %v1210 = vpack.c.b16 %v889, %v886
  %v1211 = vpack.c.b16 %v890, %v887
  %v1212 = vpack.c.b16 %v894, %v891
  %v1213 = vpack.c.b16 %v895, %v892
  %v1214 = vpack.c.b16 %v896, %v893
  %v1215 = vpack.c.b16 %v900, %v897
  %v1216 = vpack.c.b16 %v901, %v898
  %v1217 = vpack.c.b16 %v902, %v899
  %v1218 = vpack.c.b16 %v906, %v903
  %v1219 = vpack.c.b16 %v907, %v904
  %v1220 = vpack.c.b16 %v908, %v905
  %v1221 = vpack.c.b16 %v912, %v909
  %v1222 = vpack.c.b16 %v913, %v910
  %v1223 = vpack.c.b16 %v914, %v911
  %v1224 = vpack.c.b16 %v918, %v915
  %v1225 = vpack.c.b16 %v919, %v916
  %v1226 = vpack.c.b16 %v920, %v917
  %v1227 = vpack.c.b16 %v924, %v921
  %v1228 = vpack.c.b16 %v925, %v922
  %v1229 = vpack.c.b16 %v926, %v923
  %v1230 = vpack.c.b16 %v930, %v927
  %v1231 = vpack.c.b16 %v931, %v928
  %v1232 = vpack.c.b16 %v932, %v929
  %v1233 = vpack.c.b16 %v936, %v933
  %v1234 = vpack.c.b16 %v937, %v934
  %v1235 = vpack.c.b16 %v938, %v935
  %v1236 = vpack.c.b16 %v942, %v939
  %v1237 = vpack.c.b16 %v943, %v940
  %v1238 = vpack.c.b16 %v944, %v941
  %v1239 = vpack.c.b16 %v948, %v945
  %v1240 = vpack.c.b16 %v949, %v946
  %v1241 = vpack.c.b16 %v950, %v947
  %v1242 = vpack.c.b16 %v954, %v951
  %v1243 = vpack.c.b16 %v955, %v952
  %v1244 = vpack.c.b16 %v956, %v953
  %v1245 = vpack.c.b16 %v960, %v957
  %v1246 = vpack.c.b16 %v961, %v958
  %v1247 = vpack.c.b16 %v962, %v959
  %v1248 = vpack.c.b16 %v966, %v963
  %v1249 = vpack.c.b16 %v967, %v964
  %v1250 = vpack.c.b16 %v968, %v965
  %v1251 = vpack.c.b16 %v972, %v969
  %v1252 = vpack.c.b16 %v973, %v970
  %v1253 = vpack.c.b16 %v974, %v971
  %v1254 = vpack.c.b16 %v978, %v975
  %v1255 = vpack.c.b16 %v979, %v976
  %v1256 = vpack.c.b16 %v980, %v977
  %v1257 = vpack.c.b16 %v984, %v981
  %v1258 = vpack.c.b16 %v985, %v982
  %v1259 = vpack.c.b16 %v986, %v983
  %v1260 = vpack.c.b16 %v990, %v987
  %v1261 = vpack.c.b16 %v991, %v988
  %v1262 = vpack.c.b16 %v992, %v989
  %v1263 = vpack.c.b16 %v996, %v993
  %v1264 = vpack.c.b16 %v997, %v994
  %v1265 = vpack.c.b16 %v998, %v995
  %v1266 = vpack.c.b16 %v1002, %v999
  %v1267 = vpack.c.b16 %v1003, %v1000
  %v1268 = vpack.c.b16 %v1004, %v1001
  %v1269 = vpack.c.b16 %v1008, %v1005
  %v1270 = vpack.c.b16 %v1009, %v1006
  %v1271 = vpack.c.b16 %v1010, %v1007
  %v1272 = vpack.c.b16 %v1014, %v1011
  %v1273 = vpack.c.b16 %v1015, %v1012
  %v1274 = vpack.c.b16 %v1016, %v1013
  %v1275 = vpack.c.b16 %v1020, %v1017
  %v1276 = vpack.c.b16 %v1021, %v1018
  %v1277 = vpack.c.b16 %v1022, %v1019
  %v1278 = vpack.c.b16 %v1026, %v1023
  %v1279 = vpack.c.b16 %v1027, %v1024
  %v1280 = vpack.c.b16 %v1028, %v1025
  %v1281 = vpack.c.b16 %v1032, %v1029
  %v1282 = vpack.c.b16 %v1033, %v1030
  %v1283 = vpack.c.b16 %v1034, %v1031
  %v1284 = vpack.c.b16 %v1038, %v1035
  %v1285 = vpack.c.b16 %v1039, %v1036
  %v1286 = vpack.c.b16 %v1040, %v1037
  %v1287 = vpack.c.b16 %v1044, %v1041
  %v1288 = vpack.c.b16 %v1045, %v1042
  %v1289 = vpack.c.b16 %v1046, %v1043
  %v1290 = vpack.c.b16 %v1050, %v1047
  %v1291 = vpack.c.b16 %v1051, %v1048
  %v1292 = vpack.c.b16 %v1052, %v1049
  %v1293 = vpack.c.b16 %v1056, %v1053
  %v1294 = vpack.c.b16 %v1057, %v1054
  %v1295 = vpack.c.b16 %v1058, %v1055
  %v1296 = vpack.c.b16 %v1062, %v1059
  %v1297 = vpack.c.b16 %v1063, %v1060
  %v1298 = vpack.c.b16 %v1064, %v1061
  %v1299 = vpack.c.b16 %v1068, %v1065
  %v1300 = vpack.c.b16 %v1069, %v1066
  %v1301 = vpack.c.b16 %v1070, %v1067
  %v1302 = vpack.c.b16 %v1074, %v1071
  %v1303 = vpack.c.b16 %v1075, %v1072
  %v1304 = vpack.c.b16 %v1076, %v1073
  %v1305 = vpack.c.b16 %v1080, %v1077
  %v1306 = vpack.c.b16 %v1081, %v1078
  %v1307 = vpack.c.b16 %v1082, %v1079
  %v1308 = vpack.c.b16 %v1086, %v1083
  %v1309 = vpack.c.b16 %v1087, %v1084
  %v1310 = vpack.c.b16 %v1088, %v1085
  %v1311 = vpack.c.b16 %v1092, %v1089
  %v1312 = vpack.c.b16 %v1093, %v1090
  %v1313 = vpack.c.b16 %v1094, %v1091
  %v1314 = vpack.c.b16 %v1098, %v1095
  %v1315 = vpack.c.b16 %v1099, %v1096
  %v1316 = vpack.c.b16 %v1100, %v1097
  %1533 = vmatprep.subr.bf16.mxu0 %v1102
  %1534 = vmatpush1.bf16.msra.mxu0 %v1101
  %1535 = vmatprep.subr.bf16.mxu0 %v1105
  %1536 = vmatpush1.bf16.msra.mxu0 %v1104
  %1537 = vmatprep.subr.bf16.mxu0 %v1108
  %1538 = vmatpush1.bf16.msra.mxu0 %v1107
  %1539 = vmatprep.subr.bf16.mxu0 %v1111
  %1540 = vmatpush1.bf16.msra.mxu0 %v1110
  %1541 = vmatprep.subr.bf16.mxu0 %v1114
  %1542 = vmatpush1.bf16.msra.mxu0 %v1113
  %1543 = vmatprep.subr.bf16.mxu0 %v1117
  %1544 = vmatpush1.bf16.msra.mxu0 %v1116
  %1545 = vmatprep.subr.bf16.mxu0 %v1120
  %1546 = vmatpush1.bf16.msra.mxu0 %v1119
  %1547 = vmatprep.subr.bf16.mxu0 %v1123
  %1548 = vmatpush1.bf16.msra.mxu0 %v1122
  %1549 = vmatprep.subr.bf16.mxu0 %v1126
  %1550 = vmatpush1.bf16.msra.mxu0 %v1125
  %1551 = vmatprep.subr.bf16.mxu0 %v1129
  %1552 = vmatpush1.bf16.msra.mxu0 %v1128
  %1553 = vmatprep.subr.bf16.mxu0 %v1132
  %1554 = vmatpush1.bf16.msra.mxu0 %v1131
  %1555 = vmatprep.subr.bf16.mxu0 %v1135
  %1556 = vmatpush1.bf16.msra.mxu0 %v1134
  %1557 = vmatprep.subr.bf16.mxu0 %v1138
  %1558 = vmatpush1.bf16.msra.mxu0 %v1137
  %1559 = vmatprep.subr.bf16.mxu0 %v1141
  %1560 = vmatpush1.bf16.msra.mxu0 %v1140
  %1561 = vmatprep.subr.bf16.mxu0 %v1144
  %1562 = vmatpush1.bf16.msra.mxu0 %v1143
  %1563 = vmatprep.subr.bf16.mxu0 %v1147
  %1564 = vmatpush1.bf16.msra.mxu0 %v1146
  %1565 = vmatprep.mubr.bf16.mxu0 %v364
  %1566 = vmatmul.mubr.bf16.gmra.mrb[0].mxu0 %v363
  %v1567 = vpop.f32.mrb[0].mxu0
  %v1568 = vadd.f32 0.0, %v1567
  %v1569 = vpop.f32.mrb[0].mxu0
  %v1570 = vadd.f32 0.0, %v1569
  %v1571 = vpop.f32.mrb[0].mxu0
  %v1572 = vpop.f32.mrb[0].mxu0
  %1573 = vdwg.mxu0
  %1574 = vmatprep.subr.bf16.mxu0 %v1150
  %1575 = vmatpush1.bf16.msra.mxu0 %v1149
  %1576 = vmatprep.subr.bf16.mxu0 %v1153
  %1577 = vmatpush1.bf16.msra.mxu0 %v1152
  %1578 = vmatprep.subr.bf16.mxu0 %v1156
  %1579 = vmatpush1.bf16.msra.mxu0 %v1155
  %1580 = vmatprep.subr.bf16.mxu0 %v1159
  %1581 = vmatpush1.bf16.msra.mxu0 %v1158
  %1582 = vmatprep.subr.bf16.mxu0 %v1162
  %1583 = vmatpush1.bf16.msra.mxu0 %v1161
  %1584 = vmatprep.subr.bf16.mxu0 %v1165
  %1585 = vmatpush1.bf16.msra.mxu0 %v1164
  %1586 = vmatprep.subr.bf16.mxu0 %v1168
  %1587 = vmatpush1.bf16.msra.mxu0 %v1167
  %1588 = vmatprep.subr.bf16.mxu0 %v1171
  %1589 = vmatpush1.bf16.msra.mxu0 %v1170
  %1590 = vmatprep.subr.bf16.mxu0 %v1174
  %1591 = vmatpush1.bf16.msra.mxu0 %v1173
  %1592 = vmatprep.subr.bf16.mxu0 %v1177
  %1593 = vmatpush1.bf16.msra.mxu0 %v1176
  %1594 = vmatprep.subr.bf16.mxu0 %v1180
  %1595 = vmatpush1.bf16.msra.mxu0 %v1179
  %1596 = vmatprep.subr.bf16.mxu0 %v1183
  %1597 = vmatpush1.bf16.msra.mxu0 %v1182
  %1598 = vmatprep.subr.bf16.mxu0 %v1186
  %1599 = vmatpush1.bf16.msra.mxu0 %v1185
  %1600 = vmatprep.subr.bf16.mxu0 %v1189
  %1601 = vmatpush1.bf16.msra.mxu0 %v1188
  %1602 = vmatprep.subr.bf16.mxu0 %v1192
  %1603 = vmatpush1.bf16.msra.mxu0 %v1191
  %1604 = vmatprep.subr.bf16.mxu0 %v1195
  %1605 = vmatpush1.bf16.msra.mxu0 %v1194
  %1606 = vmatprep.mubr.bf16.mxu0 %v366
  %1607 = vmatmul.mubr.bf16.gmra.mrb[0].mxu0 %v365
  %v1608 = vpop.f32.mrb[0].mxu0
  %v1609 = vadd.f32 %v1568, %v1608
  %v1610 = vpop.f32.mrb[0].mxu0
  %v1611 = vadd.f32 %v1570, %v1610
  %v1612 = vpop.f32.mrb[0].mxu0
  %v1613 = vpop.f32.mrb[0].mxu0
  %1614 = vdwg.mxu0
  %1615 = vmatprep.subr.bf16.mxu0 %v1198
  %1616 = vmatpush1.bf16.msra.mxu0 %v1197
  %1617 = vmatprep.subr.bf16.mxu0 %v1201
  %1618 = vmatpush1.bf16.msra.mxu0 %v1200
  %1619 = vmatprep.subr.bf16.mxu0 %v1204
  %1620 = vmatpush1.bf16.msra.mxu0 %v1203
  %1621 = vmatprep.subr.bf16.mxu0 %v1207
  %1622 = vmatpush1.bf16.msra.mxu0 %v1206
  %1623 = vmatprep.subr.bf16.mxu0 %v1210
  %1624 = vmatpush1.bf16.msra.mxu0 %v1209
  %1625 = vmatprep.subr.bf16.mxu0 %v1213
  %1626 = vmatpush1.bf16.msra.mxu0 %v1212
  %1627 = vmatprep.subr.bf16.mxu0 %v1216
  %1628 = vmatpush1.bf16.msra.mxu0 %v1215
  %1629 = vmatprep.subr.bf16.mxu0 %v1219
  %1630 = vmatpush1.bf16.msra.mxu0 %v1218
  %1631 = vmatprep.subr.bf16.mxu0 %v1222
  %1632 = vmatpush1.bf16.msra.mxu0 %v1221
  %1633 = vmatprep.subr.bf16.mxu0 %v1225
  %1634 = vmatpush1.bf16.msra.mxu0 %v1224
  %1635 = vmatprep.subr.bf16.mxu0 %v1228
  %1636 = vmatpush1.bf16.msra.mxu0 %v1227
  %1637 = vmatprep.subr.bf16.mxu0 %v1231
  %1638 = vmatpush1.bf16.msra.mxu0 %v1230
  %1639 = vmatprep.subr.bf16.mxu0 %v1234
  %1640 = vmatpush1.bf16.msra.mxu0 %v1233
  %1641 = vmatprep.subr.bf16.mxu0 %v1237
  %1642 = vmatpush1.bf16.msra.mxu0 %v1236
  %1643 = vmatprep.subr.bf16.mxu0 %v1240
  %1644 = vmatpush1.bf16.msra.mxu0 %v1239
  %1645 = vmatprep.subr.bf16.mxu0 %v1243
  %1646 = vmatpush1.bf16.msra.mxu0 %v1242
  %1647 = vmatprep.mubr.bf16.mxu0 %v368
  %1648 = vmatmul.mubr.bf16.gmra.mrb[0].mxu0 %v367
  %v1649 = vpop.f32.mrb[0].mxu0
  %v1650 = vadd.f32 %v1609, %v1649
  %v1651 = vpop.f32.mrb[0].mxu0
  %v1652 = vadd.f32 %v1611, %v1651
  %v1653 = vpop.f32.mrb[0].mxu0
  %v1654 = vpop.f32.mrb[0].mxu0
  %1655 = vdwg.mxu0
  %1656 = vmatprep.subr.bf16.mxu0 %v1246
  %1657 = vmatpush1.bf16.msra.mxu0 %v1245
  %1658 = vmatprep.subr.bf16.mxu0 %v1249
  %1659 = vmatpush1.bf16.msra.mxu0 %v1248
  %1660 = vmatprep.subr.bf16.mxu0 %v1252
  %1661 = vmatpush1.bf16.msra.mxu0 %v1251
  %1662 = vmatprep.subr.bf16.mxu0 %v1255
  %1663 = vmatpush1.bf16.msra.mxu0 %v1254
  %1664 = vmatprep.subr.bf16.mxu0 %v1258
  %1665 = vmatpush1.bf16.msra.mxu0 %v1257
  %1666 = vmatprep.subr.bf16.mxu0 %v1261
  %1667 = vmatpush1.bf16.msra.mxu0 %v1260
  %1668 = vmatprep.subr.bf16.mxu0 %v1264
  %1669 = vmatpush1.bf16.msra.mxu0 %v1263
  %1670 = vmatprep.subr.bf16.mxu0 %v1267
  %1671 = vmatpush1.bf16.msra.mxu0 %v1266
  %1672 = vmatprep.subr.bf16.mxu0 %v1270
  %1673 = vmatpush1.bf16.msra.mxu0 %v1269
  %1674 = vmatprep.subr.bf16.mxu0 %v1273
  %1675 = vmatpush1.bf16.msra.mxu0 %v1272
  %1676 = vmatprep.subr.bf16.mxu0 %v1276
  %1677 = vmatpush1.bf16.msra.mxu0 %v1275
  %1678 = vmatprep.subr.bf16.mxu0 %v1279
  %1679 = vmatpush1.bf16.msra.mxu0 %v1278
  %1680 = vmatprep.subr.bf16.mxu0 %v1282
  %1681 = vmatpush1.bf16.msra.mxu0 %v1281
  %1682 = vmatprep.subr.bf16.mxu0 %v1285
  %1683 = vmatpush1.bf16.msra.mxu0 %v1284
  %1684 = vmatprep.subr.bf16.mxu0 %v1288
  %1685 = vmatpush1.bf16.msra.mxu0 %v1287
  %1686 = vmatprep.subr.bf16.mxu0 %v1291
  %1687 = vmatpush1.bf16.msra.mxu0 %v1290
  %1688 = vmatprep.mubr.bf16.mxu0 %v370
  %1689 = vmatmul.mubr.bf16.gmra.mrb[0].mxu0 %v369
  %v1690 = vpop.f32.mrb[0].mxu0
  %v1691 = vadd.f32 %v1650, %v1690
  %v1692 = vpop.f32.mrb[0].mxu0
  %v1693 = vadd.f32 %v1652, %v1692
  %v1694 = vpop.f32.mrb[0].mxu0
  %v1695 = vpop.f32.mrb[0].mxu0
  %1696 = vdwg.mxu0
  %1697 = vmatprep.subr.bf16.mxu0 %v1294
  %1698 = vmatpush1.bf16.msra.mxu0 %v1293
  %1699 = vmatprep.subr.bf16.mxu0 %v1297
  %1700 = vmatpush1.bf16.msra.mxu0 %v1296
  %1701 = vmatprep.subr.bf16.mxu0 %v1300
  %1702 = vmatpush1.bf16.msra.mxu0 %v1299
  %1703 = vmatprep.subr.bf16.mxu0 %v1303
  %1704 = vmatpush1.bf16.msra.mxu0 %v1302
  %1705 = vmatprep.subr.bf16.mxu0 %v1306
  %1706 = vmatpush1.bf16.msra.mxu0 %v1305
  %1707 = vmatprep.subr.bf16.mxu0 %v1309
  %1708 = vmatpush1.bf16.msra.mxu0 %v1308
  %1709 = vmatprep.subr.bf16.mxu0 %v1312
  %1710 = vmatpush1.bf16.msra.mxu0 %v1311
  %1711 = vmatprep.subr.bf16.mxu0 %v1315
  %1712 = vmatpush1.bf16.msra.mxu0 %v1314
  %1713 = vmatprep.subr.bf16.mxu0 0
  %1714 = vmatpush1.bf16.msra.mxu0 0
  %1715 = vmatprep.subr.bf16.mxu0 0
  %1716 = vmatpush1.bf16.msra.mxu0 0
  %1717 = vmatprep.subr.bf16.mxu0 0
  %1718 = vmatpush1.bf16.msra.mxu0 0
  %1719 = vmatprep.subr.bf16.mxu0 0
  %1720 = vmatpush1.bf16.msra.mxu0 0
  %1721 = vmatprep.subr.bf16.mxu0 0
  %1722 = vmatpush1.bf16.msra.mxu0 0
  %1723 = vmatprep.subr.bf16.mxu0 0
  %1724 = vmatpush1.bf16.msra.mxu0 0
  %1725 = vmatprep.subr.bf16.mxu0 0
  %1726 = vmatpush1.bf16.msra.mxu0 0
  %1727 = vmatprep.subr.bf16.mxu0 0
  %1728 = vmatpush1.bf16.msra.mxu0 0
  %1729 = vmatprep.mubr.bf16.mxu0 0
  %1730 = vmatmul.mubr.bf16.gmra.mrb[0].mxu0 %v371
  %v1731 = vpop.f32.mrb[0].mxu0
  %v1732 = vadd.f32 %v1691, %v1731
  %v1733 = vpop.f32.mrb[0].mxu0
  %v1734 = vadd.f32 %v1693, %v1733
  %v1735 = vpop.f32.mrb[0].mxu0
  %v1736 = vpop.f32.mrb[0].mxu0
  %1737 = vdwg.mxu0
  %1738 = vmatprep.subr.bf16.mxu0 0
  %1739 = vmatpush1.bf16.msra.mxu0 %v1103
  %1740 = vmatprep.subr.bf16.mxu0 0
  %1741 = vmatpush1.bf16.msra.mxu0 %v1106
  %1742 = vmatprep.subr.bf16.mxu0 0
  %1743 = vmatpush1.bf16.msra.mxu0 %v1109
  %1744 = vmatprep.subr.bf16.mxu0 0
  %1745 = vmatpush1.bf16.msra.mxu0 %v1112
  %1746 = vmatprep.subr.bf16.mxu0 0
  %1747 = vmatpush1.bf16.msra.mxu0 %v1115
  %1748 = vmatprep.subr.bf16.mxu0 0
  %1749 = vmatpush1.bf16.msra.mxu0 %v1118
  %1750 = vmatprep.subr.bf16.mxu0 0
  %1751 = vmatpush1.bf16.msra.mxu0 %v1121
  %1752 = vmatprep.subr.bf16.mxu0 0
  %1753 = vmatpush1.bf16.msra.mxu0 %v1124
  %1754 = vmatprep.subr.bf16.mxu0 0
  %1755 = vmatpush1.bf16.msra.mxu0 %v1127
  %1756 = vmatprep.subr.bf16.mxu0 0
  %1757 = vmatpush1.bf16.msra.mxu0 %v1130
  %1758 = vmatprep.subr.bf16.mxu0 0
  %1759 = vmatpush1.bf16.msra.mxu0 %v1133
  %1760 = vmatprep.subr.bf16.mxu0 0
  %1761 = vmatpush1.bf16.msra.mxu0 %v1136
  %1762 = vmatprep.subr.bf16.mxu0 0
  %1763 = vmatpush1.bf16.msra.mxu0 %v1139
  %1764 = vmatprep.subr.bf16.mxu0 0
  %1765 = vmatpush1.bf16.msra.mxu0 %v1142
  %1766 = vmatprep.subr.bf16.mxu0 0
  %1767 = vmatpush1.bf16.msra.mxu0 %v1145
  %1768 = vmatprep.subr.bf16.mxu0 0
  %1769 = vmatpush1.bf16.msra.mxu0 %v1148
  %1770 = vmatprep.mubr.bf16.mxu0 %v364
  %1771 = vmatmul.mubr.bf16.gmra.mrb[0].mxu0 %v363
  %v1772 = vpop.f32.mrb[0].mxu0
  %v1773 = vadd.f32 0.0, %v1772
  %v1774 = vpop.f32.mrb[0].mxu0
  %v1775 = vpop.f32.mrb[0].mxu0
  %v1776 = vpop.f32.mrb[0].mxu0
  %1777 = vdwg.mxu0
  %1778 = vmatprep.subr.bf16.mxu0 0
  %1779 = vmatpush1.bf16.msra.mxu0 %v1151
  %1780 = vmatprep.subr.bf16.mxu0 0
  %1781 = vmatpush1.bf16.msra.mxu0 %v1154
  %1782 = vmatprep.subr.bf16.mxu0 0
  %1783 = vmatpush1.bf16.msra.mxu0 %v1157
  %1784 = vmatprep.subr.bf16.mxu0 0
  %1785 = vmatpush1.bf16.msra.mxu0 %v1160
  %1786 = vmatprep.subr.bf16.mxu0 0
  %1787 = vmatpush1.bf16.msra.mxu0 %v1163
  %1788 = vmatprep.subr.bf16.mxu0 0
  %1789 = vmatpush1.bf16.msra.mxu0 %v1166
  %1790 = vmatprep.subr.bf16.mxu0 0
  %1791 = vmatpush1.bf16.msra.mxu0 %v1169
  %1792 = vmatprep.subr.bf16.mxu0 0
  %1793 = vmatpush1.bf16.msra.mxu0 %v1172
  %1794 = vmatprep.subr.bf16.mxu0 0
  %1795 = vmatpush1.bf16.msra.mxu0 %v1175
  %1796 = vmatprep.subr.bf16.mxu0 0
  %1797 = vmatpush1.bf16.msra.mxu0 %v1178
  %1798 = vmatprep.subr.bf16.mxu0 0
  %1799 = vmatpush1.bf16.msra.mxu0 %v1181
  %1800 = vmatprep.subr.bf16.mxu0 0
  %1801 = vmatpush1.bf16.msra.mxu0 %v1184
  %1802 = vmatprep.subr.bf16.mxu0 0
  %1803 = vmatpush1.bf16.msra.mxu0 %v1187
  %1804 = vmatprep.subr.bf16.mxu0 0
  %1805 = vmatpush1.bf16.msra.mxu0 %v1190
  %1806 = vmatprep.subr.bf16.mxu0 0
  %1807 = vmatpush1.bf16.msra.mxu0 %v1193
  %1808 = vmatprep.subr.bf16.mxu0 0
  %1809 = vmatpush1.bf16.msra.mxu0 %v1196
  %1810 = vmatprep.mubr.bf16.mxu0 %v366
  %1811 = vmatmul.mubr.bf16.gmra.mrb[0].mxu0 %v365
  %v1812 = vpop.f32.mrb[0].mxu0
  %v1813 = vadd.f32 %v1773, %v1812
  %v1814 = vpop.f32.mrb[0].mxu0
  %v1815 = vpop.f32.mrb[0].mxu0
  %v1816 = vpop.f32.mrb[0].mxu0
  %1817 = vdwg.mxu0
  %1818 = vmatprep.subr.bf16.mxu0 0
  %1819 = vmatpush1.bf16.msra.mxu0 %v1199
  %1820 = vmatprep.subr.bf16.mxu0 0
  %1821 = vmatpush1.bf16.msra.mxu0 %v1202
  %1822 = vmatprep.subr.bf16.mxu0 0
  %1823 = vmatpush1.bf16.msra.mxu0 %v1205
  %1824 = vmatprep.subr.bf16.mxu0 0
  %1825 = vmatpush1.bf16.msra.mxu0 %v1208
  %1826 = vmatprep.subr.bf16.mxu0 0
  %1827 = vmatpush1.bf16.msra.mxu0 %v1211
  %1828 = vmatprep.subr.bf16.mxu0 0
  %1829 = vmatpush1.bf16.msra.mxu0 %v1214
  %1830 = vmatprep.subr.bf16.mxu0 0
  %1831 = vmatpush1.bf16.msra.mxu0 %v1217
  %1832 = vmatprep.subr.bf16.mxu0 0
  %1833 = vmatpush1.bf16.msra.mxu0 %v1220
  %1834 = vmatprep.subr.bf16.mxu0 0
  %1835 = vmatpush1.bf16.msra.mxu0 %v1223
  %1836 = vmatprep.subr.bf16.mxu0 0
  %1837 = vmatpush1.bf16.msra.mxu0 %v1226
  %1838 = vmatprep.subr.bf16.mxu0 0
  %1839 = vmatpush1.bf16.msra.mxu0 %v1229
  %1840 = vmatprep.subr.bf16.mxu0 0
  %1841 = vmatpush1.bf16.msra.mxu0 %v1232
  %1842 = vmatprep.subr.bf16.mxu0 0
  %1843 = vmatpush1.bf16.msra.mxu0 %v1235
  %1844 = vmatprep.subr.bf16.mxu0 0
  %1845 = vmatpush1.bf16.msra.mxu0 %v1238
  %1846 = vmatprep.subr.bf16.mxu0 0
  %1847 = vmatpush1.bf16.msra.mxu0 %v1241
  %1848 = vmatprep.subr.bf16.mxu0 0
  %1849 = vmatpush1.bf16.msra.mxu0 %v1244
  %1850 = vmatprep.mubr.bf16.mxu0 %v368
  %1851 = vmatmul.mubr.bf16.gmra.mrb[0].mxu0 %v367
  %v1852 = vpop.f32.mrb[0].mxu0
  %v1853 = vadd.f32 %v1813, %v1852
  %v1854 = vpop.f32.mrb[0].mxu0
  %v1855 = vpop.f32.mrb[0].mxu0
  %v1856 = vpop.f32.mrb[0].mxu0
  %1857 = vdwg.mxu0
  %1858 = vmatprep.subr.bf16.mxu0 0
  %1859 = vmatpush1.bf16.msra.mxu0 %v1247
  %1860 = vmatprep.subr.bf16.mxu0 0
  %1861 = vmatpush1.bf16.msra.mxu0 %v1250
  %1862 = vmatprep.subr.bf16.mxu0 0
  %1863 = vmatpush1.bf16.msra.mxu0 %v1253
  %1864 = vmatprep.subr.bf16.mxu0 0
  %1865 = vmatpush1.bf16.msra.mxu0 %v1256
  %1866 = vmatprep.subr.bf16.mxu0 0
  %1867 = vmatpush1.bf16.msra.mxu0 %v1259
  %1868 = vmatprep.subr.bf16.mxu0 0
  %1869 = vmatpush1.bf16.msra.mxu0 %v1262
  %1870 = vmatprep.subr.bf16.mxu0 0
  %1871 = vmatpush1.bf16.msra.mxu0 %v1265
  %1872 = vmatprep.subr.bf16.mxu0 0
  %1873 = vmatpush1.bf16.msra.mxu0 %v1268
  %1874 = vmatprep.subr.bf16.mxu0 0
  %1875 = vmatpush1.bf16.msra.mxu0 %v1271
  %1876 = vmatprep.subr.bf16.mxu0 0
  %1877 = vmatpush1.bf16.msra.mxu0 %v1274
  %1878 = vmatprep.subr.bf16.mxu0 0
  %1879 = vmatpush1.bf16.msra.mxu0 %v1277
  %1880 = vmatprep.subr.bf16.mxu0 0
  %1881 = vmatpush1.bf16.msra.mxu0 %v1280
  %1882 = vmatprep.subr.bf16.mxu0 0
  %1883 = vmatpush1.bf16.msra.mxu0 %v1283
  %1884 = vmatprep.subr.bf16.mxu0 0
  %1885 = vmatpush1.bf16.msra.mxu0 %v1286
  %1886 = vmatprep.subr.bf16.mxu0 0
  %1887 = vmatpush1.bf16.msra.mxu0 %v1289
  %1888 = vmatprep.subr.bf16.mxu0 0
  %1889 = vmatpush1.bf16.msra.mxu0 %v1292
  %1890 = vmatprep.mubr.bf16.mxu0 %v370
  %1891 = vmatmul.mubr.bf16.gmra.mrb[0].mxu0 %v369
  %v1892 = vpop.f32.mrb[0].mxu0
  %v1893 = vadd.f32 %v1853, %v1892
  %v1894 = vpop.f32.mrb[0].mxu0
  %v1895 = vpop.f32.mrb[0].mxu0
  %v1896 = vpop.f32.mrb[0].mxu0
  %1897 = vdwg.mxu0
  %1898 = vmatprep.subr.bf16.mxu0 0
  %1899 = vmatpush1.bf16.msra.mxu0 %v1295
  %1900 = vmatprep.subr.bf16.mxu0 0
  %1901 = vmatpush1.bf16.msra.mxu0 %v1298
  %1902 = vmatprep.subr.bf16.mxu0 0
  %1903 = vmatpush1.bf16.msra.mxu0 %v1301
  %1904 = vmatprep.subr.bf16.mxu0 0
  %1905 = vmatpush1.bf16.msra.mxu0 %v1304
  %1906 = vmatprep.subr.bf16.mxu0 0
  %1907 = vmatpush1.bf16.msra.mxu0 %v1307
  %1908 = vmatprep.subr.bf16.mxu0 0
  %1909 = vmatpush1.bf16.msra.mxu0 %v1310
  %1910 = vmatprep.subr.bf16.mxu0 0
  %1911 = vmatpush1.bf16.msra.mxu0 %v1313
  %1912 = vmatprep.subr.bf16.mxu0 0
  %1913 = vmatpush1.bf16.msra.mxu0 %v1316
  %1914 = vmatprep.subr.bf16.mxu0 0
  %1915 = vmatpush1.bf16.msra.mxu0 0
  %1916 = vmatprep.subr.bf16.mxu0 0
  %1917 = vmatpush1.bf16.msra.mxu0 0
  %1918 = vmatprep.subr.bf16.mxu0 0
  %1919 = vmatpush1.bf16.msra.mxu0 0
  %1920 = vmatprep.subr.bf16.mxu0 0
  %1921 = vmatpush1.bf16.msra.mxu0 0
  %1922 = vmatprep.subr.bf16.mxu0 0
  %1923 = vmatpush1.bf16.msra.mxu0 0
  %1924 = vmatprep.subr.bf16.mxu0 0
  %1925 = vmatpush1.bf16.msra.mxu0 0
  %1926 = vmatprep.subr.bf16.mxu0 0
  %1927 = vmatpush1.bf16.msra.mxu0 0
  %1928 = vmatprep.subr.bf16.mxu0 0
  %1929 = vmatpush1.bf16.msra.mxu0 0
  %1930 = vmatprep.mubr.bf16.mxu0 0
  %1931 = vmatmul.mubr.bf16.gmra.mrb[0].mxu0 %v371
  %v1932 = vpop.f32.mrb[0].mxu0
  %v1933 = vadd.f32 %v1893, %v1932
  %v1934 = vpop.f32.mrb[0].mxu0
  %v1935 = vpop.f32.mrb[0].mxu0
  %v1936 = vpop.f32.mrb[0].mxu0
  %1937 = vdwg.mxu0
  %1938 = vst [vmem:[%s2] sm:$0xff] %v1732
  %1939 = vst [vmem:[%s2 + $0x8] sm:$0xff] %v1734
  %1940 = vst [vmem:[%s2 + $0x10] sm:$0xff] %v1933
  // Predicated region
  $region10: #{postprocess.1} parent=0 // pred_check
    _
  $region11: #{postprocess.1} parent=0 // pred_check_branch
    %1942 = sbr.rel (0) target = $region13
  $region12: #{postprocess.1} parent=0 // pred_region
    _
  $region13: #{postprocess.1} parent=0 // pred_fallthru
    _
  // Predicated region
  $region14: #{postprocess.1} parent=0 // pred_check
    _
  $region15: #{postprocess.1} parent=0 // pred_check_branch
    %1944 = sbr.rel (0) target = $region17
  $region16: #{postprocess.1} parent=0 // pred_region
    _
  $region17: #{postprocess.1} parent=0 // pred_fallthru
    _

</llo_original>
